<compile_context>
chip_gen: v6e
topology: v6e:2x2x1
jax: 0.10.0
libtpu: 0.0.40
codegen_flags: <defaults>
</compile_context>

<pallas_src>
import functools

import jax
import jax.numpy as jnp
from jax.experimental import pallas as pl
from jax.experimental.pallas import tpu as pltpu


def _round_up(x: int, m: int) -> int:
    return ((x + m - 1) // m) * m


def _pad_dim(d: int) -> int:
    # 129..256 -> 256 (v6e/v7x MXU is 256 wide); otherwise next multiple of 128.
    if 128 < d <= 256:
        return 256
    return _round_up(d, 128)


def _vmem_budget_bytes() -> int:
    cap = 128 * 1024 * 1024
    try:
        info = pltpu.get_tpu_info()
        cap = int(getattr(info, "vmem_capacity_bytes", cap))
    except Exception:
        pass
    # Leave ~20% headroom for compiler scratch / semaphores (v7x: ~51 MiB of 64;
    # v5e/v6e: ~102 MiB of 128).
    return int(cap * 0.8)


def _est_vmem_bytes(tm: int, dp: int, tl: int, out_bytes: int) -> int:
    x_b = 2 * tm * dp * 2                 # double-buffered bf16 x tile
    o_b = 2 * tm * dp * out_bytes         # double-buffered out tile
    w_b = 2 * 2 * (dp * tl * 2)           # W1 + W2 tiles (bf16), worst-case 2 buffers
    bias = 2 * (tl + dp) * 4
    h_b = tm * tl * (4 + 2)               # f32 h + bf16 copy for the 2nd matmul
    acc = tm * dp * 4                     # f32 accumulator scratch
    return x_b + o_b + w_b + bias + h_b + acc


def prepare_params(w1, b1, w2, b2, *, block_m: int = 512, out_dtype=jnp.float32):
    """Pad + cast weights/biases ONCE (outside the per-call jit) and pick the latent
    tile TL so the working set fits the generation-aware VMEM budget."""
    D, L = w1.shape
    Dp, Lp = _pad_dim(D), _pad_dim(L)
    budget = _vmem_budget_bytes()
    out_bytes = jnp.dtype(out_dtype).itemsize

    TL = Lp
    while TL > 256 and _est_vmem_bytes(block_m, Dp, TL, out_bytes) > budget:
        TL = _round_up(TL // 2, 256)
    Lp = _round_up(Lp, TL)

    w1p = jnp.pad(w1, ((0, Dp - D), (0, Lp - L))).astype(jnp.bfloat16)
    w2p = jnp.pad(w2, ((0, Lp - L), (0, Dp - D))).astype(jnp.bfloat16)
    b1p = jnp.pad(b1.reshape(1, -1), ((0, 0), (0, Lp - L))).astype(jnp.float32)
    b2p = jnp.pad(b2.reshape(1, -1), ((0, 0), (0, Dp - D))).astype(jnp.float32)

    meta = dict(out_dim=D, latent_tile=TL, vmem_limit=budget)
    return (w1p, b1p, w2p, b2p), meta


def mlp_kernel(x_ref, w1_ref, b1_ref, w2_ref, b2_ref, o_ref, acc_ref):
    l = pl.program_id(1)

    @pl.when(l == 0)
    def _():
        acc_ref[...] = jnp.zeros_like(acc_ref)

    # Encoder tile: x @ W1[:, l-tile] (MXU, bf16 in / f32 acc), bias + ReLU in f32.
    h = jnp.dot(x_ref[...], w1_ref[...], preferred_element_type=jnp.float32)
    h = jnp.maximum(h + b1_ref[...], 0.0)
    # Dropout(p=0.1): identity (eval mode).
    # Decoder tile: accumulate h @ W2[l-tile, :] into the f32 accumulator.
    acc_ref[...] += jnp.dot(h.astype(jnp.bfloat16), w2_ref[...],
                            preferred_element_type=jnp.float32)

    @pl.when(l == pl.num_programs(1) - 1)
    def _():
        o_ref[...] = (acc_ref[...] + b2_ref[...]).astype(o_ref.dtype)


@functools.partial(jax.jit, static_argnames=(
    "out_dim", "latent_tile", "block_m", "vmem_limit",
    "single_buffer_weights", "out_dtype"))
def mlp_forward(x, w1p, b1p, w2p, b2p, *, out_dim, latent_tile,
                block_m: int = 512, vmem_limit=None,
                single_buffer_weights: bool = True, out_dtype=jnp.float32):
    """x: [B, inputdim] (f32 or bf16); padded params from prepare_params."""
    B, D = x.shape
    Dp, Lp = w1p.shape
    TL = latent_tile

    # Large batch tile (multiple of 16 for bf16 sublane packing).
    TM = _round_up(min(block_m, _round_up(B, 16)), 16)
    Bp = _round_up(B, TM)

    if x.dtype != jnp.bfloat16:
        x = x.astype(jnp.bfloat16)
    if (Bp, Dp) != (B, D):
        x = jnp.pad(x, ((0, Bp - B), (0, Dp - D)))

    grid = (Bp // TM, Lp // TL)
    resident = (Lp == TL)

    def w_spec(shape, index_map, constant):
        # Single-buffer weights that never change block index (no re-fetch needed).
        if single_buffer_weights and constant:
            return pl.BlockSpec(shape, index_map, pipeline_mode=pl.Buffered(1))
        return pl.BlockSpec(shape, index_map)

    out_bytes = jnp.dtype(out_dtype).itemsize
    cost = pl.CostEstimate(
        flops=4 * Bp * Dp * Lp,
        transcendentals=0,
        bytes_accessed=(Bp * Dp * 2                                    # x (bf16)
                        + grid[0] * (2 * Dp * Lp * 2 + (Lp + Dp) * 4)  # weights/biases
                        + Bp * Dp * out_bytes),                        # out
    )

    if vmem_limit is None:
        vmem_limit = _vmem_budget_bytes()

    out_p = pl.pallas_call(
        mlp_kernel,
        out_shape=jax.ShapeDtypeStruct((Bp, Dp), out_dtype),
        grid_spec=pltpu.PrefetchScalarGridSpec(
            num_scalar_prefetch=0,
            grid=grid,
            in_specs=[
                pl.BlockSpec((TM, Dp), lambda i, l: (i, 0)),         # x (streamed)
                w_spec((Dp, TL), lambda i, l: (0, l), resident),     # W1
                w_spec((1, TL), lambda i, l: (0, l), resident),      # b1
                w_spec((TL, Dp), lambda i, l: (l, 0), resident),     # W2
                w_spec((1, Dp), lambda i, l: (0, 0), True),          # b2 (always const)
            ],
            out_specs=pl.BlockSpec((TM, Dp), lambda i, l: (i, 0)),
            scratch_shapes=[pltpu.VMEM((TM, Dp), jnp.float32)],
        ),
        compiler_params=pltpu.CompilerParams(
            dimension_semantics=("parallel", "arbitrary"),
            vmem_limit_bytes=int(vmem_limit),
        ),
        cost_estimate=cost,
    )(x, w1p, b1p, w2p, b2p)

    return out_p[:B, :out_dim]


def init_params(key, inputdim, latentdim):
    """Deterministic init mimicking nn.Linear's uniform(-1/sqrt(fan_in), 1/sqrt(fan_in)).
       Weights stored already transposed to [in, out] for the kernel."""
    k1, k2, k3, k4 = jax.random.split(key, 4)
    bound1 = 1.0 / (inputdim ** 0.5)
    bound2 = 1.0 / (latentdim ** 0.5)
    w1 = jax.random.uniform(k1, (inputdim, latentdim), jnp.float32, -bound1, bound1)
    b1 = jax.random.uniform(k2, (latentdim,), jnp.float32, -bound1, bound1)
    w2 = jax.random.uniform(k3, (latentdim, inputdim), jnp.float32, -bound2, bound2)
    b2 = jax.random.uniform(k4, (inputdim,), jnp.float32, -bound2, bound2)
    return w1, b1, w2, b2


if __name__ == "__main__":
    key = jax.random.PRNGKey(0)
    kx, kp = jax.random.split(key)

    # Small demo shapes; deliberately non-128-multiple to exercise padding.
    batch, inputdim, latentdim = 200, 48, 24
    x = jax.random.normal(kx, (batch, inputdim), jnp.float32)
    w1, b1, w2, b2 = init_params(kp, inputdim, latentdim)

    (w1p, b1p, w2p, b2p), meta = prepare_params(w1, b1, w2, b2, block_m=512)
    fwd = functools.partial(
        mlp_forward, out_dim=meta["out_dim"], latent_tile=meta["latent_tile"],
        block_m=512, vmem_limit=meta["vmem_limit"])

    try:
        out = fwd(x, w1p, b1p, w2p, b2p, single_buffer_weights=True)
        out = jax.block_until_ready(out)
    except Exception:
        # Fallback if pipeline_mode=pl.Buffered(1) is unsupported on this jax build.
        out = fwd(x, w1p, b1p, w2p, b2p, single_buffer_weights=False)
        out = jax.block_until_ready(out)

    assert out.shape == (batch, inputdim)

    # Tight check against the same bf16-in / f32-accumulate recipe.
    xb, w1b, w2b = (a.astype(jnp.bfloat16) for a in (x, w1, w2))
    h_ref = jnp.maximum(
        jnp.dot(xb, w1b, preferred_element_type=jnp.float32) + b1.reshape(1, -1), 0.0
    ).astype(jnp.bfloat16)
    ref_bf16 = jnp.dot(h_ref, w2b, preferred_element_type=jnp.float32) + b2.reshape(1, -1)
    assert jnp.allclose(out, ref_bf16, atol=1e-4, rtol=1e-4)

    # Sanity check vs the full-f32 PyTorch-style forward (loose: bf16 matmul error).
    ref_f32 = jnp.maximum(x @ w1 + b1, 0.0) @ w2 + b2
    assert jnp.allclose(out, ref_f32, atol=5e-2, rtol=5e-2)

    print("KERNEL_OK")
</pallas_src>

<mosaic_0001>
module attributes {stable_mosaic.version = 11 : i64} {
  func.func @mlp_kernel(%arg0: i32, %arg1: i32, %arg2: memref<208x128xbf16, #tpu.memory_space<vmem>>, %arg3: memref<128x128xbf16, #tpu.memory_space<vmem>>, %arg4: memref<1x128xf32, #tpu.memory_space<vmem>>, %arg5: memref<128x128xbf16, #tpu.memory_space<vmem>>, %arg6: memref<1x128xf32, #tpu.memory_space<vmem>>, %arg7: memref<208x128xf32, #tpu.memory_space<vmem>>, %arg8: memref<208x128xf32, #tpu.memory_space<vmem>>) attributes {dimension_semantics = [#tpu.dimension_semantics<parallel>, #tpu.dimension_semantics<arbitrary>], iteration_bounds = array<i64: 1, 1>, scalar_prefetch = 0 : i64, scratch_operands = 1 : i64, tpu.core_type = #tpu.core_type<tc>, window_params = [{transform_indices = @transform_0, window_bounds = array<i64: 208, 128>}, {pipeline_mode = #tpu.pipeline_mode<synchronous>, transform_indices = @transform_1, window_bounds = array<i64: 128, 128>}, {pipeline_mode = #tpu.pipeline_mode<synchronous>, transform_indices = @transform_2, window_bounds = array<i64: 1, 128>}, {pipeline_mode = #tpu.pipeline_mode<synchronous>, transform_indices = @transform_3, window_bounds = array<i64: 128, 128>}, {pipeline_mode = #tpu.pipeline_mode<synchronous>, transform_indices = @transform_4, window_bounds = array<i64: 1, 128>}, {transform_indices = @transform_5, window_bounds = array<i64: 208, 128>}]} {
    %c0_i32 = arith.constant 0 : i32
    %0 = arith.cmpi eq, %arg1, %c0_i32 : i32
    %1 = arith.extui %0 : i1 to i32
    %c0_i32_0 = arith.constant 0 : i32
    %2 = arith.cmpi ne, %1, %c0_i32_0 : i32
    scf.if %2 {
      %cst_16 = arith.constant 0.000000e+00 : f32
      %20 = vector.broadcast %cst_16 : f32 to vector<208x128xf32>
      %c0_17 = arith.constant 0 : index
      %c0_18 = arith.constant 0 : index
      %21 = vector.load %arg8[%c0_17, %c0_18] : memref<208x128xf32, #tpu.memory_space<vmem>>, vector<208x128xf32>
      tpu.vector_store %arg8[%c0_17, %c0_18], %20 {strides = array<i32>} : memref<208x128xf32, #tpu.memory_space<vmem>>, vector<208x128xf32>,
    } else {
    }
    %c0 = arith.constant 0 : index
    %c0_1 = arith.constant 0 : index
    %3 = vector.load %arg2[%c0, %c0_1] : memref<208x128xbf16, #tpu.memory_space<vmem>>, vector<208x128xbf16>
    %c0_2 = arith.constant 0 : index
    %c0_3 = arith.constant 0 : index
    %4 = vector.load %arg3[%c0_2, %c0_3] : memref<128x128xbf16, #tpu.memory_space<vmem>>, vector<128x128xbf16>
    %cst = arith.constant dense<0.000000e+00> : vector<208x128xf32>
    %5 = tpu.matmul %3, %4, %cst {dimension_numbers = #tpu.dot_dimension_numbers<[1], [0], [0], [1], [0, 0, 1, 1], [], []>} : vector<208x128xbf16>, vector<128x128xbf16>, vector<208x128xf32> -> vector<208x128xf32>
    %c0_4 = arith.constant 0 : index
    %c0_5 = arith.constant 0 : index
    %6 = vector.load %arg4[%c0_4, %c0_5] : memref<1x128xf32, #tpu.memory_space<vmem>>, vector<1x128xf32>
    %7 = vector.broadcast %6 : vector<1x128xf32> to vector<208x128xf32>
    %8 = arith.addf %5, %7 : vector<208x128xf32>
    %cst_6 = arith.constant 0.000000e+00 : f32
    %9 = vector.broadcast %cst_6 : f32 to vector<208x128xf32>
    %10 = arith.maximumf %8, %9 : vector<208x128xf32>
    %c0_7 = arith.constant 0 : index
    %c0_8 = arith.constant 0 : index
    %11 = vector.load %arg8[%c0_7, %c0_8] : memref<208x128xf32, #tpu.memory_space<vmem>>, vector<208x128xf32>
    %12 = arith.truncf %10 : vector<208x128xf32> to vector<208x128xbf16>
    %c0_9 = arith.constant 0 : index
    %c0_10 = arith.constant 0 : index
    %13 = vector.load %arg5[%c0_9, %c0_10] : memref<128x128xbf16, #tpu.memory_space<vmem>>, vector<128x128xbf16>
    %cst_11 = arith.constant dense<0.000000e+00> : vector<208x128xf32>
    %14 = tpu.matmul %12, %13, %cst_11 {dimension_numbers = #tpu.dot_dimension_numbers<[1], [0], [0], [1], [0, 0, 1, 1], [], []>} : vector<208x128xbf16>, vector<128x128xbf16>, vector<208x128xf32> -> vector<208x128xf32>
    %15 = arith.addf %11, %14 : vector<208x128xf32>
    %c0_12 = arith.constant 0 : index
    %c0_13 = arith.constant 0 : index
    %16 = vector.load %arg8[%c0_12, %c0_13] : memref<208x128xf32, #tpu.memory_space<vmem>>, vector<208x128xf32>
    tpu.vector_store %arg8[%c0_12, %c0_13], %15 {strides = array<i32>} : memref<208x128xf32, #tpu.memory_space<vmem>>, vector<208x128xf32>,
    %c0_i32_14 = arith.constant 0 : i32
    %17 = arith.cmpi eq, %arg1, %c0_i32_14 : i32
    %18 = arith.extui %17 : i1 to i32
    %c0_i32_15 = arith.constant 0 : i32
    %19 = arith.cmpi ne, %18, %c0_i32_15 : i32
    scf.if %19 {
      %c0_16 = arith.constant 0 : index
      %c0_17 = arith.constant 0 : index
      %20 = vector.load %arg8[%c0_16, %c0_17] : memref<208x128xf32, #tpu.memory_space<vmem>>, vector<208x128xf32>
      %c0_18 = arith.constant 0 : index
      %c0_19 = arith.constant 0 : index
      %21 = vector.load %arg6[%c0_18, %c0_19] : memref<1x128xf32, #tpu.memory_space<vmem>>, vector<1x128xf32>
      %22 = vector.broadcast %21 : vector<1x128xf32> to vector<208x128xf32>
      %23 = arith.addf %20, %22 : vector<208x128xf32>
      %c0_20 = arith.constant 0 : index
      %c0_21 = arith.constant 0 : index
      %24 = vector.load %arg7[%c0_20, %c0_21] : memref<208x128xf32, #tpu.memory_space<vmem>>, vector<208x128xf32>
      tpu.vector_store %arg7[%c0_20, %c0_21], %23 {strides = array<i32>} : memref<208x128xf32, #tpu.memory_space<vmem>>, vector<208x128xf32>,
    } else {
    }
    return
  }
  func.func @transform_0(%arg0: i32, %arg1: i32) -> (i32, i32) {
    %c0_i32 = arith.constant 0 : i32
    %c0_i32_0 = arith.constant 0 : i32
    return %arg0, %c0_i32 : i32, i32
  }
  func.func @transform_1(%arg0: i32, %arg1: i32) -> (i32, i32) {
    %c0_i32 = arith.constant 0 : i32
    %c0_i32_0 = arith.constant 0 : i32
    return %c0_i32, %arg1 : i32, i32
  }
  func.func @transform_2(%arg0: i32, %arg1: i32) -> (i32, i32) {
    %c0_i32 = arith.constant 0 : i32
    %c0_i32_0 = arith.constant 0 : i32
    return %c0_i32, %arg1 : i32, i32
  }
  func.func @transform_3(%arg0: i32, %arg1: i32) -> (i32, i32) {
    %c0_i32 = arith.constant 0 : i32
    %c0_i32_0 = arith.constant 0 : i32
    return %arg1, %c0_i32 : i32, i32
  }
  func.func @transform_4(%arg0: i32, %arg1: i32) -> (i32, i32) {
    %c0_i32 = arith.constant 0 : i32
    %c0_i32_0 = arith.constant 0 : i32
    %c0_i32_1 = arith.constant 0 : i32
    return %c0_i32, %c0_i32_0 : i32, i32
  }
  func.func @transform_5(%arg0: i32, %arg1: i32) -> (i32, i32) {
    %c0_i32 = arith.constant 0 : i32
    %c0_i32_0 = arith.constant 0 : i32
    return %arg0, %c0_i32 : i32, i32
  }
}

module attributes {stable_mosaic.version = 11 : i64} {
  func.func @mlp_kernel(%arg0: i32, %arg1: i32, %arg2: memref<208x128xbf16, #tpu.memory_space<vmem>>, %arg3: memref<128x128xbf16, #tpu.memory_space<vmem>>, %arg4: memref<1x128xf32, #tpu.memory_space<vmem>>, %arg5: memref<128x128xbf16, #tpu.memory_space<vmem>>, %arg6: memref<1x128xf32, #tpu.memory_space<vmem>>, %arg7: memref<208x128xf32, #tpu.memory_space<vmem>>, %arg8: memref<208x128xf32, #tpu.memory_space<vmem>>) attributes {dimension_semantics = [#tpu.dimension_semantics<parallel>, #tpu.dimension_semantics<arbitrary>], iteration_bounds = array<i64: 1, 1>, scalar_prefetch = 0 : i64, scratch_operands = 1 : i64, tpu.core_type = #tpu.core_type<tc>, window_params = [{transform_indices = @transform_0, window_bounds = array<i64: 208, 128>}, {transform_indices = @transform_1, window_bounds = array<i64: 128, 128>}, {transform_indices = @transform_2, window_bounds = array<i64: 1, 128>}, {transform_indices = @transform_3, window_bounds = array<i64: 128, 128>}, {pipeline_mode = #tpu.pipeline_mode<synchronous>, transform_indices = @transform_4, window_bounds = array<i64: 1, 128>}, {transform_indices = @transform_5, window_bounds = array<i64: 208, 128>}]} {
    %c0_i32 = arith.constant 0 : i32
    %0 = arith.cmpi eq, %arg1, %c0_i32 : i32
    %1 = arith.extui %0 : i1 to i32
    %c0_i32_0 = arith.constant 0 : i32
    %2 = arith.cmpi ne, %1, %c0_i32_0 : i32
    scf.if %2 {
      %cst_16 = arith.constant 0.000000e+00 : f32
      %20 = vector.broadcast %cst_16 : f32 to vector<208x128xf32>
      %c0_17 = arith.constant 0 : index
      %c0_18 = arith.constant 0 : index
      %21 = vector.load %arg8[%c0_17, %c0_18] : memref<208x128xf32, #tpu.memory_space<vmem>>, vector<208x128xf32>
      tpu.vector_store %arg8[%c0_17, %c0_18], %20 {strides = array<i32>} : memref<208x128xf32, #tpu.memory_space<vmem>>, vector<208x128xf32>,
    } else {
    }
    %c0 = arith.constant 0 : index
    %c0_1 = arith.constant 0 : index
    %3 = vector.load %arg2[%c0, %c0_1] : memref<208x128xbf16, #tpu.memory_space<vmem>>, vector<208x128xbf16>
    %c0_2 = arith.constant 0 : index
    %c0_3 = arith.constant 0 : index
    %4 = vector.load %arg3[%c0_2, %c0_3] : memref<128x128xbf16, #tpu.memory_space<vmem>>, vector<128x128xbf16>
    %cst = arith.constant dense<0.000000e+00> : vector<208x128xf32>
    %5 = tpu.matmul %3, %4, %cst {dimension_numbers = #tpu.dot_dimension_numbers<[1], [0], [0], [1], [0, 0, 1, 1], [], []>} : vector<208x128xbf16>, vector<128x128xbf16>, vector<208x128xf32> -> vector<208x128xf32>
    %c0_4 = arith.constant 0 : index
    %c0_5 = arith.constant 0 : index
    %6 = vector.load %arg4[%c0_4, %c0_5] : memref<1x128xf32, #tpu.memory_space<vmem>>, vector<1x128xf32>
    %7 = vector.broadcast %6 : vector<1x128xf32> to vector<208x128xf32>
    %8 = arith.addf %5, %7 : vector<208x128xf32>
    %cst_6 = arith.constant 0.000000e+00 : f32
    %9 = vector.broadcast %cst_6 : f32 to vector<208x128xf32>
    %10 = arith.maximumf %8, %9 : vector<208x128xf32>
    %c0_7 = arith.constant 0 : index
    %c0_8 = arith.constant 0 : index
    %11 = vector.load %arg8[%c0_7, %c0_8] : memref<208x128xf32, #tpu.memory_space<vmem>>, vector<208x128xf32>
    %12 = arith.truncf %10 : vector<208x128xf32> to vector<208x128xbf16>
    %c0_9 = arith.constant 0 : index
    %c0_10 = arith.constant 0 : index
    %13 = vector.load %arg5[%c0_9, %c0_10] : memref<128x128xbf16, #tpu.memory_space<vmem>>, vector<128x128xbf16>
    %cst_11 = arith.constant dense<0.000000e+00> : vector<208x128xf32>
    %14 = tpu.matmul %12, %13, %cst_11 {dimension_numbers = #tpu.dot_dimension_numbers<[1], [0], [0], [1], [0, 0, 1, 1], [], []>} : vector<208x128xbf16>, vector<128x128xbf16>, vector<208x128xf32> -> vector<208x128xf32>
    %15 = arith.addf %11, %14 : vector<208x128xf32>
    %c0_12 = arith.constant 0 : index
    %c0_13 = arith.constant 0 : index
    %16 = vector.load %arg8[%c0_12, %c0_13] : memref<208x128xf32, #tpu.memory_space<vmem>>, vector<208x128xf32>
    tpu.vector_store %arg8[%c0_12, %c0_13], %15 {strides = array<i32>} : memref<208x128xf32, #tpu.memory_space<vmem>>, vector<208x128xf32>,
    %c0_i32_14 = arith.constant 0 : i32
    %17 = arith.cmpi eq, %arg1, %c0_i32_14 : i32
    %18 = arith.extui %17 : i1 to i32
    %c0_i32_15 = arith.constant 0 : i32
    %19 = arith.cmpi ne, %18, %c0_i32_15 : i32
    scf.if %19 {
      %c0_16 = arith.constant 0 : index
      %c0_17 = arith.constant 0 : index
      %20 = vector.load %arg8[%c0_16, %c0_17] : memref<208x128xf32, #tpu.memory_space<vmem>>, vector<208x128xf32>
      %c0_18 = arith.constant 0 : index
      %c0_19 = arith.constant 0 : index
      %21 = vector.load %arg6[%c0_18, %c0_19] : memref<1x128xf32, #tpu.memory_space<vmem>>, vector<1x128xf32>
      %22 = vector.broadcast %21 : vector<1x128xf32> to vector<208x128xf32>
      %23 = arith.addf %20, %22 : vector<208x128xf32>
      %c0_20 = arith.constant 0 : index
      %c0_21 = arith.constant 0 : index
      %24 = vector.load %arg7[%c0_20, %c0_21] : memref<208x128xf32, #tpu.memory_space<vmem>>, vector<208x128xf32>
      tpu.vector_store %arg7[%c0_20, %c0_21], %23 {strides = array<i32>} : memref<208x128xf32, #tpu.memory_space<vmem>>, vector<208x128xf32>,
    } else {
    }
    return
  }
  func.func @transform_0(%arg0: i32, %arg1: i32) -> (i32, i32) {
    %c0_i32 = arith.constant 0 : i32
    %c0_i32_0 = arith.constant 0 : i32
    return %arg0, %c0_i32 : i32, i32
  }
  func.func @transform_1(%arg0: i32, %arg1: i32) -> (i32, i32) {
    %c0_i32 = arith.constant 0 : i32
    %c0_i32_0 = arith.constant 0 : i32
    return %c0_i32, %arg1 : i32, i32
  }
  func.func @transform_2(%arg0: i32, %arg1: i32) -> (i32, i32) {
    %c0_i32 = arith.constant 0 : i32
    %c0_i32_0 = arith.constant 0 : i32
    return %c0_i32, %arg1 : i32, i32
  }
  func.func @transform_3(%arg0: i32, %arg1: i32) -> (i32, i32) {
    %c0_i32 = arith.constant 0 : i32
    %c0_i32_0 = arith.constant 0 : i32
    return %arg1, %c0_i32 : i32, i32
  }
  func.func @transform_4(%arg0: i32, %arg1: i32) -> (i32, i32) {
    %c0_i32 = arith.constant 0 : i32
    %c0_i32_0 = arith.constant 0 : i32
    %c0_i32_1 = arith.constant 0 : i32
    return %c0_i32, %c0_i32_0 : i32, i32
  }
  func.func @transform_5(%arg0: i32, %arg1: i32) -> (i32, i32) {
    %c0_i32 = arith.constant 0 : i32
    %c0_i32_0 = arith.constant 0 : i32
    return %arg0, %c0_i32 : i32, i32
  }
}

</mosaic_0001>

<llo_original>
// kernel: mlp_forward.1
$region0: #{mlp_forward.1}
  #allocation0 [shape = 'u32[]', space=smem, size = 0x4, offset = 0x4, fixed_abs, tag = 'smem constant byte address 0x4 - core index']
  #allocation1 [shape = 'u32[144,128]{1,0:T(1,128)}', space=vmem, size = 0x12000, scoped, tag = 'internal scratch']
  #allocation2 [shape = 'f32[208,128]{1,0:T(8,128)}', space=vmem, size = 0x1a000, scoped, tag = 'scratch operand']
  %s0 = inlined_call_operand.vmem [shape: bf16[208,128], index: 0, kind: input, shape index: {}]
  %s1 = inlined_call_operand.vmem [shape: bf16[128,128], index: 1, kind: input, shape index: {}]
  %s2 = inlined_call_operand.vmem [shape: f32[1,128], index: 2, kind: input, shape index: {}]
  %s3 = inlined_call_operand.vmem [shape: bf16[128,128], index: 3, kind: input, shape index: {}]
  %s4 = inlined_call_operand.vmem [shape: f32[1,128], index: 4, kind: input, shape index: {}]
  %s5 = inlined_call_operand.vmem [shape: f32[208,128], index: 5, kind: output, shape index: {}]
  %s6 = sld [smem:[#allocation0]]
  $region38: #{mlp_forward.1} parent=0
    _
  %s8 = ssub.s32 1, %s6
  %s9 = scalar_select 0, %s8, %s6
  // Predicated region
  $region2: #{mlp_forward.1} parent=0 // pred_check
    _
  $region3: #{mlp_forward.1} parent=0 // pred_check_branch
    %11 = sbr.rel (0) target = $region5
  $region4: #{mlp_forward.1} parent=0 // pred_region
    _
  $region5: #{mlp_forward.1} parent=0 // pred_fallthru
    _
  // Predicated region
  $region6: #{mlp_forward.1} parent=0 // pred_check
    _
  $region7: #{mlp_forward.1} parent=0 // pred_check_branch
    %13 = sbr.rel (0) target = $region9
  $region8: #{mlp_forward.1} parent=0 // pred_region
    _
  $region9: #{mlp_forward.1} parent=0 // pred_fallthru
    _
  // Predicated region
  $region10: #{mlp_forward.1} parent=0 // pred_check
    _
  $region11: #{mlp_forward.1} parent=0 // pred_check_branch
    %15 = sbr.rel (0) target = $region13
  $region12: #{mlp_forward.1} parent=0 // pred_region
    _
  $region13: #{mlp_forward.1} parent=0 // pred_fallthru
    _
  // Predicated region
  $region14: #{mlp_forward.1} parent=0 // pred_check
    _
  $region15: #{mlp_forward.1} parent=0 // pred_check_branch
    %17 = sbr.rel (0) target = $region17
  $region16: #{mlp_forward.1} parent=0 // pred_region
    _
  $region17: #{mlp_forward.1} parent=0 // pred_fallthru
    _
  // Predicated region
  $region18: #{mlp_forward.1} parent=0 // pred_check
    _
  $region19: #{mlp_forward.1} parent=0 // pred_check_branch
    %19 = sbr.rel (0) target = $region21
  $region20: #{mlp_forward.1} parent=0 // pred_region
    _
  $region21: #{mlp_forward.1} parent=0 // pred_fallthru
    _
  %p21 = scmp.eq.s32.totalorder 0, 0
  // Predicated region
  $region22: #{mlp_forward.1} parent=0 // pred_check
    %p22 = pneg %p21
  $region23: #{mlp_forward.1} parent=0 // pred_check_branch
    %24 = sbr.rel (%p22) target = $region25
  $region24: #{mlp_forward.1} parent=0 // pred_region
    %25 = vst [vmem:[#allocation2] sm:$0xff] 0.0
    %26 = vst [vmem:[#allocation2 + $0x8] sm:$0xff] 0.0
    %27 = vst [vmem:[#allocation2 + $0x10] sm:$0xff] 0.0
    %28 = vst [vmem:[#allocation2 + $0x18] sm:$0xff] 0.0
    %29 = vst [vmem:[#allocation2 + $0x20] sm:$0xff] 0.0
    %30 = vst [vmem:[#allocation2 + $0x28] sm:$0xff] 0.0
    %31 = vst [vmem:[#allocation2 + $0x30] sm:$0xff] 0.0
    %32 = vst [vmem:[#allocation2 + $0x38] sm:$0xff] 0.0
    %33 = vst [vmem:[#allocation2 + $0x40] sm:$0xff] 0.0
    %34 = vst [vmem:[#allocation2 + $0x48] sm:$0xff] 0.0
    %35 = vst [vmem:[#allocation2 + $0x50] sm:$0xff] 0.0
    %36 = vst [vmem:[#allocation2 + $0x58] sm:$0xff] 0.0
    %37 = vst [vmem:[#allocation2 + $0x60] sm:$0xff] 0.0
    %38 = vst [vmem:[#allocation2 + $0x68] sm:$0xff] 0.0
    %39 = vst [vmem:[#allocation2 + $0x70] sm:$0xff] 0.0
    %40 = vst [vmem:[#allocation2 + $0x78] sm:$0xff] 0.0
    %41 = vst [vmem:[#allocation2 + $0x80] sm:$0xff] 0.0
    %42 = vst [vmem:[#allocation2 + $0x88] sm:$0xff] 0.0
    %43 = vst [vmem:[#allocation2 + $0x90] sm:$0xff] 0.0
    %44 = vst [vmem:[#allocation2 + $0x98] sm:$0xff] 0.0
    %45 = vst [vmem:[#allocation2 + $0xa0] sm:$0xff] 0.0
    %46 = vst [vmem:[#allocation2 + $0xa8] sm:$0xff] 0.0
    %47 = vst [vmem:[#allocation2 + $0xb0] sm:$0xff] 0.0
    %48 = vst [vmem:[#allocation2 + $0xb8] sm:$0xff] 0.0
    %49 = vst [vmem:[#allocation2 + $0xc0] sm:$0xff] 0.0
    %50 = vst [vmem:[#allocation2 + $0xc8] sm:$0xff] 0.0
  $region25: #{mlp_forward.1} parent=0 // pred_fallthru
    _
  %v51 = vld [vmem:[%s0] sm:$0xf]
  %v52 = vld [vmem:[%s0 + $0x4] sm:$0xf]
  %v53 = vld [vmem:[%s0 + $0x8] sm:$0xf]
  %v54 = vld [vmem:[%s0 + $0xc] sm:$0xf]
  %v55 = vld [vmem:[%s0 + $0x10] sm:$0xf]
  %v56 = vld [vmem:[%s0 + $0x14] sm:$0xf]
  %v57 = vld [vmem:[%s0 + $0x18] sm:$0xf]
  %v58 = vld [vmem:[%s0 + $0x1c] sm:$0xf]
  %v59 = vld [vmem:[%s0 + $0x20] sm:$0xf]
  %v60 = vld [vmem:[%s0 + $0x24] sm:$0xf]
  %v61 = vld [vmem:[%s0 + $0x28] sm:$0xf]
  %v62 = vld [vmem:[%s0 + $0x2c] sm:$0xf]
  %v63 = vld [vmem:[%s0 + $0x30] sm:$0xf]
  %v64 = vld [vmem:[%s0 + $0x34] sm:$0xf]
  %v65 = vld [vmem:[%s0 + $0x38] sm:$0xf]
  %v66 = vld [vmem:[%s0 + $0x3c] sm:$0xf]
  %v67 = vld [vmem:[%s0 + $0x40] sm:$0xf]
  %v68 = vld [vmem:[%s0 + $0x44] sm:$0xf]
  %v69 = vld [vmem:[%s0 + $0x48] sm:$0xf]
  %v70 = vld [vmem:[%s0 + $0x4c] sm:$0xf]
  %v71 = vld [vmem:[%s0 + $0x50] sm:$0xf]
  %v72 = vld [vmem:[%s0 + $0x54] sm:$0xf]
  %v73 = vld [vmem:[%s0 + $0x58] sm:$0xf]
  %v74 = vld [vmem:[%s0 + $0x5c] sm:$0xf]
  %v75 = vld [vmem:[%s0 + $0x60] sm:$0xf]
  %v76 = vld [vmem:[%s0 + $0x64] sm:$0xf]
  %v77 = vld [vmem:[%s1] sm:$0xf]
  %v78 = vld [vmem:[%s1 + $0x4] sm:$0xf]
  %v79 = vld [vmem:[%s1 + $0x8] sm:$0xf]
  %v80 = vld [vmem:[%s1 + $0xc] sm:$0xf]
  %v81 = vld [vmem:[%s1 + $0x10] sm:$0xf]
  %v82 = vld [vmem:[%s1 + $0x14] sm:$0xf]
  %v83 = vld [vmem:[%s1 + $0x18] sm:$0xf]
  %v84 = vld [vmem:[%s1 + $0x1c] sm:$0xf]
  %v85 = vld [vmem:[%s1 + $0x20] sm:$0xf]
  %v86 = vld [vmem:[%s1 + $0x24] sm:$0xf]
  %v87 = vld [vmem:[%s1 + $0x28] sm:$0xf]
  %v88 = vld [vmem:[%s1 + $0x2c] sm:$0xf]
  %v89 = vld [vmem:[%s1 + $0x30] sm:$0xf]
  %v90 = vld [vmem:[%s1 + $0x34] sm:$0xf]
  %v91 = vld [vmem:[%s1 + $0x38] sm:$0xf]
  %v92 = vld [vmem:[%s1 + $0x3c] sm:$0xf]
  %v93 = vld [vmem:[%s2] sm:$0x1]
  %v95 = vlaneseq
  %v96 = vshrl.u32 %v95, 7
  %v97 = vsub.s32 0, %v96
  %v98 = vrot.slane %v93, %v97
  %v126 = vunpack.c.l.b16 %v51
  %v127 = vunpack.c.l.b16 %v52
  %v128 = vunpack.c.l.b16 %v53
  %v129 = vunpack.c.l.b16 %v54
  %v130 = vunpack.c.l.b16 %v55
  %v131 = vunpack.c.l.b16 %v56
  %v132 = vunpack.c.l.b16 %v57
  %v133 = vunpack.c.l.b16 %v58
  %v134 = vunpack.c.l.b16 %v59
  %v135 = vunpack.c.l.b16 %v60
  %v136 = vunpack.c.l.b16 %v61
  %v137 = vunpack.c.l.b16 %v62
  %v138 = vunpack.c.l.b16 %v63
  %v139 = vunpack.c.l.b16 %v64
  %v140 = vunpack.c.l.b16 %v65
  %v141 = vunpack.c.l.b16 %v66
  %v142 = vunpack.c.l.b16 %v67
  %v143 = vunpack.c.l.b16 %v68
  %v144 = vunpack.c.l.b16 %v69
  %v145 = vunpack.c.l.b16 %v70
  %v146 = vunpack.c.l.b16 %v71
  %v147 = vunpack.c.l.b16 %v72
  %v148 = vunpack.c.l.b16 %v73
  %v149 = vunpack.c.l.b16 %v74
  %v150 = vunpack.c.l.b16 %v75
  %v151 = vunpack.c.l.b16 %v76
  %v152 = vpack.c.b16 %v127, %v126
  %v153 = vpack.c.b16 %v129, %v128
  %v154 = vpack.c.b16 %v131, %v130
  %v155 = vpack.c.b16 %v133, %v132
  %v156 = vpack.c.b16 %v135, %v134
  %v157 = vpack.c.b16 %v137, %v136
  %v158 = vpack.c.b16 %v139, %v138
  %v159 = vpack.c.b16 %v141, %v140
  %v160 = vpack.c.b16 %v143, %v142
  %v161 = vpack.c.b16 %v145, %v144
  %v162 = vpack.c.b16 %v147, %v146
  %v163 = vpack.c.b16 %v149, %v148
  %v164 = vpack.c.b16 %v151, %v150
  %v194 = vunpack.c.l.b16 %v77
  %v195 = vunpack.c.l.b16 %v78
  %v196 = vunpack.c.l.b16 %v79
  %v197 = vunpack.c.l.b16 %v80
  %v198 = vunpack.c.l.b16 %v81
  %v199 = vunpack.c.l.b16 %v82
  %v200 = vunpack.c.l.b16 %v83
  %v201 = vunpack.c.l.b16 %v84
  %v202 = vunpack.c.l.b16 %v85
  %v203 = vunpack.c.l.b16 %v86
  %v204 = vunpack.c.l.b16 %v87
  %v205 = vunpack.c.l.b16 %v88
  %v206 = vunpack.c.l.b16 %v89
  %v207 = vunpack.c.l.b16 %v90
  %v208 = vunpack.c.l.b16 %v91
  %v209 = vunpack.c.l.b16 %v92
  %v210 = vpack.c.b16 %v195, %v194
  %v211 = vpack.c.b16 %v197, %v196
  %v212 = vpack.c.b16 %v199, %v198
  %v213 = vpack.c.b16 %v201, %v200
  %v214 = vpack.c.b16 %v203, %v202
  %v215 = vpack.c.b16 %v205, %v204
  %v216 = vpack.c.b16 %v207, %v206
  %v217 = vpack.c.b16 %v209, %v208
  %226 = vmatprep.subr.bf16.mxu0 0
  %227 = vmatpush1.bf16.msra.mxu0 %v217
  %228 = vmatprep.subr.bf16.mxu0 0
  %229 = vmatpush1.bf16.msra.mxu0 %v216
  %230 = vmatprep.subr.bf16.mxu0 0
  %231 = vmatpush1.bf16.msra.mxu0 %v215
  %232 = vmatprep.subr.bf16.mxu0 0
  %233 = vmatpush1.bf16.msra.mxu0 %v214
  %234 = vmatprep.subr.bf16.mxu0 0
  %235 = vmatpush1.bf16.msra.mxu0 %v213
  %236 = vmatprep.subr.bf16.mxu0 0
  %237 = vmatpush1.bf16.msra.mxu0 %v212
  %238 = vmatprep.subr.bf16.mxu0 0
  %239 = vmatpush1.bf16.msra.mxu0 %v211
  %240 = vmatprep.subr.bf16.mxu0 0
  %241 = vmatpush1.bf16.msra.mxu0 %v210
  %242 = vmatprep.subr.bf16.mxu0 0
  %243 = vmatpush2.bf16.msra.mxu0 0
  %244 = vmatprep.subr.bf16.mxu0 0
  %245 = vmatpush2.bf16.msra.mxu0 0
  %246 = vmatprep.subr.bf16.mxu0 0
  %247 = vmatpush2.bf16.msra.mxu0 0
  %248 = vmatprep.subr.bf16.mxu0 0
  %249 = vmatpush2.bf16.msra.mxu0 0
  %250 = vmatprep.subr.bf16.mxu0 0
  %251 = vmatpush2.bf16.msra.mxu0 0
  %252 = vmatprep.subr.bf16.mxu0 0
  %253 = vmatpush2.bf16.msra.mxu0 0
  %254 = vmatprep.subr.bf16.mxu0 0
  %255 = vmatpush2.bf16.msra.mxu0 0
  %256 = vmatprep.subr.bf16.mxu0 0
  %257 = vmatpush2.bf16.msra.mxu0 0
  %258 = vmatprep.mubr.bf16.mxu0 0
  %259 = vmatmul.mubr.bf16.gmra.mxu0 %v152
  %v260 = vpop.f32.mrf.mxu0
  %v261 = vadd.f32 %v98, %v260
  %v262 = vpop.f32.mrf.mxu0
  %v263 = vpop.f32.mrf.mxu0
  %v264 = vadd.f32 %v98, %v263
  %v265 = vpop.f32.mrf.mxu0
  %266 = vmatprep.mubr.bf16.mxu0 0
  %267 = vmatmul.mubr.bf16.gmra.mxu0 %v153
  %v268 = vpop.f32.mrf.mxu0
  %v269 = vadd.f32 %v98, %v268
  %v270 = vpop.f32.mrf.mxu0
  %v271 = vpop.f32.mrf.mxu0
  %v272 = vadd.f32 %v98, %v271
  %v273 = vpop.f32.mrf.mxu0
  %274 = vmatprep.mubr.bf16.mxu0 0
  %275 = vmatmul.mubr.bf16.gmra.mxu0 %v154
  %v276 = vpop.f32.mrf.mxu0
  %v277 = vadd.f32 %v98, %v276
  %v278 = vpop.f32.mrf.mxu0
  %v279 = vpop.f32.mrf.mxu0
  %v280 = vadd.f32 %v98, %v279
  %v281 = vpop.f32.mrf.mxu0
  %282 = vmatprep.mubr.bf16.mxu0 0
  %283 = vmatmul.mubr.bf16.gmra.mxu0 %v155
  %v284 = vpop.f32.mrf.mxu0
  %v285 = vadd.f32 %v98, %v284
  %v286 = vpop.f32.mrf.mxu0
  %v287 = vpop.f32.mrf.mxu0
  %v288 = vadd.f32 %v98, %v287
  %v289 = vpop.f32.mrf.mxu0
  %290 = vmatprep.mubr.bf16.mxu0 0
  %291 = vmatmul.mubr.bf16.gmra.mxu0 %v156
  %v292 = vpop.f32.mrf.mxu0
  %v293 = vadd.f32 %v98, %v292
  %v294 = vpop.f32.mrf.mxu0
  %v295 = vpop.f32.mrf.mxu0
  %v296 = vadd.f32 %v98, %v295
  %v297 = vpop.f32.mrf.mxu0
  %298 = vmatprep.mubr.bf16.mxu0 0
  %299 = vmatmul.mubr.bf16.gmra.mxu0 %v157
  %v300 = vpop.f32.mrf.mxu0
  %v301 = vadd.f32 %v98, %v300
  %v302 = vpop.f32.mrf.mxu0
  %v303 = vpop.f32.mrf.mxu0
  %v304 = vadd.f32 %v98, %v303
  %v305 = vpop.f32.mrf.mxu0
  %306 = vmatprep.mubr.bf16.mxu0 0
  %307 = vmatmul.mubr.bf16.gmra.mxu0 %v158
  %v308 = vpop.f32.mrf.mxu0
  %v309 = vadd.f32 %v98, %v308
  %v310 = vpop.f32.mrf.mxu0
  %v311 = vpop.f32.mrf.mxu0
  %v312 = vadd.f32 %v98, %v311
  %v313 = vpop.f32.mrf.mxu0
  %314 = vmatprep.mubr.bf16.mxu0 0
  %315 = vmatmul.mubr.bf16.gmra.mxu0 %v159
  %v316 = vpop.f32.mrf.mxu0
  %v317 = vadd.f32 %v98, %v316
  %v318 = vpop.f32.mrf.mxu0
  %v319 = vpop.f32.mrf.mxu0
  %v320 = vadd.f32 %v98, %v319
  %v321 = vpop.f32.mrf.mxu0
  %322 = vmatprep.mubr.bf16.mxu0 0
  %323 = vmatmul.mubr.bf16.gmra.mxu0 %v160
  %v324 = vpop.f32.mrf.mxu0
  %v325 = vadd.f32 %v98, %v324
  %v326 = vpop.f32.mrf.mxu0
  %v327 = vpop.f32.mrf.mxu0
  %v328 = vadd.f32 %v98, %v327
  %v329 = vpop.f32.mrf.mxu0
  %330 = vmatprep.mubr.bf16.mxu0 0
  %331 = vmatmul.mubr.bf16.gmra.mxu0 %v161
  %v332 = vpop.f32.mrf.mxu0
  %v333 = vadd.f32 %v98, %v332
  %v334 = vpop.f32.mrf.mxu0
  %v335 = vpop.f32.mrf.mxu0
  %v336 = vadd.f32 %v98, %v335
  %v337 = vpop.f32.mrf.mxu0
  %338 = vmatprep.mubr.bf16.mxu0 0
  %339 = vmatmul.mubr.bf16.gmra.mxu0 %v162
  %v340 = vpop.f32.mrf.mxu0
  %v341 = vadd.f32 %v98, %v340
  %v342 = vpop.f32.mrf.mxu0
  %v343 = vpop.f32.mrf.mxu0
  %v344 = vadd.f32 %v98, %v343
  %v345 = vpop.f32.mrf.mxu0
  %346 = vmatprep.mubr.bf16.mxu0 0
  %347 = vmatmul.mubr.bf16.gmra.mxu0 %v163
  %v348 = vpop.f32.mrf.mxu0
  %v349 = vadd.f32 %v98, %v348
  %v350 = vpop.f32.mrf.mxu0
  %v351 = vpop.f32.mrf.mxu0
  %v352 = vadd.f32 %v98, %v351
  %v353 = vpop.f32.mrf.mxu0
  %354 = vmatprep.mubr.bf16.mxu0 0
  %355 = vmatmul.mubr.bf16.gmra.mxu0 %v164
  %v356 = vpop.f32.mrf.mxu0
  %v357 = vadd.f32 %v98, %v356
  %v358 = vpop.f32.mrf.mxu0
  %v359 = vpop.f32.mrf.mxu0
  %v360 = vadd.f32 %v98, %v359
  %v361 = vpop.f32.mrf.mxu0
  %362 = vdwg.mxu0
  %v363 = vmax.f32 %v261, 0.0
  %v364 = vmax.f32 %v264, 0.0
  %v365 = vmax.f32 %v269, 0.0
  %v366 = vmax.f32 %v272, 0.0
  %v367 = vmax.f32 %v277, 0.0
  %v368 = vmax.f32 %v280, 0.0
  %v369 = vmax.f32 %v285, 0.0
  %v370 = vmax.f32 %v288, 0.0
  %v371 = vmax.f32 %v293, 0.0
  %v372 = vmax.f32 %v296, 0.0
  %v373 = vmax.f32 %v301, 0.0
  %v374 = vmax.f32 %v304, 0.0
  %v375 = vmax.f32 %v309, 0.0
  %v376 = vmax.f32 %v312, 0.0
  %v377 = vmax.f32 %v317, 0.0
  %v378 = vmax.f32 %v320, 0.0
  %v379 = vmax.f32 %v325, 0.0
  %v380 = vmax.f32 %v328, 0.0
  %v381 = vmax.f32 %v333, 0.0
  %v382 = vmax.f32 %v336, 0.0
  %v383 = vmax.f32 %v341, 0.0
  %v384 = vmax.f32 %v344, 0.0
  %v385 = vmax.f32 %v349, 0.0
  %v386 = vmax.f32 %v352, 0.0
  %v387 = vmax.f32 %v357, 0.0
  %v388 = vmax.f32 %v360, 0.0
  %v389 = vld [vmem:[#allocation2] sm:$0xff]
  %v390 = vld [vmem:[#allocation2 + $0x8] sm:$0xff]
  %v391 = vld [vmem:[#allocation2 + $0x10] sm:$0xff]
  %v392 = vld [vmem:[#allocation2 + $0x18] sm:$0xff]
  %v393 = vld [vmem:[#allocation2 + $0x20] sm:$0xff]
  %v394 = vld [vmem:[#allocation2 + $0x28] sm:$0xff]
  %v395 = vld [vmem:[#allocation2 + $0x30] sm:$0xff]
  %v396 = vld [vmem:[#allocation2 + $0x38] sm:$0xff]
  %v397 = vld [vmem:[#allocation2 + $0x40] sm:$0xff]
  %v398 = vld [vmem:[#allocation2 + $0x48] sm:$0xff]
  %v399 = vld [vmem:[#allocation2 + $0x50] sm:$0xff]
  %v400 = vld [vmem:[#allocation2 + $0x58] sm:$0xff]
  %v401 = vld [vmem:[#allocation2 + $0x60] sm:$0xff]
  %v402 = vld [vmem:[#allocation2 + $0x68] sm:$0xff]
  %v403 = vld [vmem:[#allocation2 + $0x70] sm:$0xff]
  %v404 = vld [vmem:[#allocation2 + $0x78] sm:$0xff]
  %v405 = vld [vmem:[#allocation2 + $0x80] sm:$0xff]
  %v406 = vld [vmem:[#allocation2 + $0x88] sm:$0xff]
  %v407 = vld [vmem:[#allocation2 + $0x90] sm:$0xff]
  %v408 = vld [vmem:[#allocation2 + $0x98] sm:$0xff]
  %v409 = vld [vmem:[#allocation2 + $0xa0] sm:$0xff]
  %v410 = vld [vmem:[#allocation2 + $0xa8] sm:$0xff]
  %v411 = vld [vmem:[#allocation2 + $0xb0] sm:$0xff]
  %v412 = vld [vmem:[#allocation2 + $0xb8] sm:$0xff]
  %v413 = vld [vmem:[#allocation2 + $0xc0] sm:$0xff]
  %v414 = vld [vmem:[#allocation2 + $0xc8] sm:$0xff]
  %v415 = vpack.c.bf16 %v364, %v363
  %v416 = vpack.c.bf16 %v366, %v365
  %v417 = vpack.c.bf16 %v368, %v367
  %v418 = vpack.c.bf16 %v370, %v369
  %v419 = vpack.c.bf16 %v372, %v371
  %v420 = vpack.c.bf16 %v374, %v373
  %v421 = vpack.c.bf16 %v376, %v375
  %v422 = vpack.c.bf16 %v378, %v377
  %v423 = vpack.c.bf16 %v380, %v379
  %v424 = vpack.c.bf16 %v382, %v381
  %v425 = vpack.c.bf16 %v384, %v383
  %v426 = vpack.c.bf16 %v386, %v385
  %v427 = vpack.c.bf16 %v388, %v387
  %v428 = vld [vmem:[%s3] sm:$0xf]
  %v429 = vld [vmem:[%s3 + $0x4] sm:$0xf]
  %v430 = vld [vmem:[%s3 + $0x8] sm:$0xf]
  %v431 = vld [vmem:[%s3 + $0xc] sm:$0xf]
  %v432 = vld [vmem:[%s3 + $0x10] sm:$0xf]
  %v433 = vld [vmem:[%s3 + $0x14] sm:$0xf]
  %v434 = vld [vmem:[%s3 + $0x18] sm:$0xf]
  %v435 = vld [vmem:[%s3 + $0x1c] sm:$0xf]
  %v436 = vld [vmem:[%s3 + $0x20] sm:$0xf]
  %v437 = vld [vmem:[%s3 + $0x24] sm:$0xf]
  %v438 = vld [vmem:[%s3 + $0x28] sm:$0xf]
  %v439 = vld [vmem:[%s3 + $0x2c] sm:$0xf]
  %v440 = vld [vmem:[%s3 + $0x30] sm:$0xf]
  %v441 = vld [vmem:[%s3 + $0x34] sm:$0xf]
  %v442 = vld [vmem:[%s3 + $0x38] sm:$0xf]
  %v443 = vld [vmem:[%s3 + $0x3c] sm:$0xf]
  %v460 = vunpack.c.l.b16 %v428
  %v461 = vunpack.c.l.b16 %v429
  %v462 = vunpack.c.l.b16 %v430
  %v463 = vunpack.c.l.b16 %v431
  %v464 = vunpack.c.l.b16 %v432
  %v465 = vunpack.c.l.b16 %v433
  %v466 = vunpack.c.l.b16 %v434
  %v467 = vunpack.c.l.b16 %v435
  %v468 = vunpack.c.l.b16 %v436
  %v469 = vunpack.c.l.b16 %v437
  %v470 = vunpack.c.l.b16 %v438
  %v471 = vunpack.c.l.b16 %v439
  %v472 = vunpack.c.l.b16 %v440
  %v473 = vunpack.c.l.b16 %v441
  %v474 = vunpack.c.l.b16 %v442
  %v475 = vunpack.c.l.b16 %v443
  %v476 = vpack.c.b16 %v461, %v460
  %v477 = vpack.c.b16 %v463, %v462
  %v478 = vpack.c.b16 %v465, %v464
  %v479 = vpack.c.b16 %v467, %v466
  %v480 = vpack.c.b16 %v469, %v468
  %v481 = vpack.c.b16 %v471, %v470
  %v482 = vpack.c.b16 %v473, %v472
  %v483 = vpack.c.b16 %v475, %v474
  %492 = vmatprep.subr.bf16.mxu0 0
  %493 = vmatpush1.bf16.msra.mxu0 %v483
  %494 = vmatprep.subr.bf16.mxu0 0
  %495 = vmatpush1.bf16.msra.mxu0 %v482
  %496 = vmatprep.subr.bf16.mxu0 0
  %497 = vmatpush1.bf16.msra.mxu0 %v481
  %498 = vmatprep.subr.bf16.mxu0 0
  %499 = vmatpush1.bf16.msra.mxu0 %v480
  %500 = vmatprep.subr.bf16.mxu0 0
  %501 = vmatpush1.bf16.msra.mxu0 %v479
  %502 = vmatprep.subr.bf16.mxu0 0
  %503 = vmatpush1.bf16.msra.mxu0 %v478
  %504 = vmatprep.subr.bf16.mxu0 0
  %505 = vmatpush1.bf16.msra.mxu0 %v477
  %506 = vmatprep.subr.bf16.mxu0 0
  %507 = vmatpush1.bf16.msra.mxu0 %v476
  %508 = vmatprep.subr.bf16.mxu0 0
  %509 = vmatpush2.bf16.msra.mxu0 0
  %510 = vmatprep.subr.bf16.mxu0 0
  %511 = vmatpush2.bf16.msra.mxu0 0
  %512 = vmatprep.subr.bf16.mxu0 0
  %513 = vmatpush2.bf16.msra.mxu0 0
  %514 = vmatprep.subr.bf16.mxu0 0
  %515 = vmatpush2.bf16.msra.mxu0 0
  %516 = vmatprep.subr.bf16.mxu0 0
  %517 = vmatpush2.bf16.msra.mxu0 0
  %518 = vmatprep.subr.bf16.mxu0 0
  %519 = vmatpush2.bf16.msra.mxu0 0
  %520 = vmatprep.subr.bf16.mxu0 0
  %521 = vmatpush2.bf16.msra.mxu0 0
  %522 = vmatprep.subr.bf16.mxu0 0
  %523 = vmatpush2.bf16.msra.mxu0 0
  %524 = vmatprep.mubr.bf16.mxu0 0
  %525 = vmatmul.mubr.bf16.gmra.mxu0 %v415
  %v526 = vpop.f32.mrf.mxu0
  %v527 = vadd.f32 0.0, %v526
  %v528 = vpop.f32.mrf.mxu0
  %v529 = vpop.f32.mrf.mxu0
  %v530 = vadd.f32 0.0, %v529
  %v531 = vpop.f32.mrf.mxu0
  %532 = vmatprep.mubr.bf16.mxu0 0
  %533 = vmatmul.mubr.bf16.gmra.mxu0 %v416
  %v534 = vpop.f32.mrf.mxu0
  %v535 = vadd.f32 0.0, %v534
  %v536 = vpop.f32.mrf.mxu0
  %v537 = vpop.f32.mrf.mxu0
  %v538 = vadd.f32 0.0, %v537
  %v539 = vpop.f32.mrf.mxu0
  %540 = vmatprep.mubr.bf16.mxu0 0
  %541 = vmatmul.mubr.bf16.gmra.mxu0 %v417
  %v542 = vpop.f32.mrf.mxu0
  %v543 = vadd.f32 0.0, %v542
  %v544 = vpop.f32.mrf.mxu0
  %v545 = vpop.f32.mrf.mxu0
  %v546 = vadd.f32 0.0, %v545
  %v547 = vpop.f32.mrf.mxu0
  %548 = vmatprep.mubr.bf16.mxu0 0
  %549 = vmatmul.mubr.bf16.gmra.mxu0 %v418
  %v550 = vpop.f32.mrf.mxu0
  %v551 = vadd.f32 0.0, %v550
  %v552 = vpop.f32.mrf.mxu0
  %v553 = vpop.f32.mrf.mxu0
  %v554 = vadd.f32 0.0, %v553
  %v555 = vpop.f32.mrf.mxu0
  %556 = vmatprep.mubr.bf16.mxu0 0
  %557 = vmatmul.mubr.bf16.gmra.mxu0 %v419
  %v558 = vpop.f32.mrf.mxu0
  %v559 = vadd.f32 0.0, %v558
  %v560 = vpop.f32.mrf.mxu0
  %v561 = vpop.f32.mrf.mxu0
  %v562 = vadd.f32 0.0, %v561
  %v563 = vpop.f32.mrf.mxu0
  %564 = vmatprep.mubr.bf16.mxu0 0
  %565 = vmatmul.mubr.bf16.gmra.mxu0 %v420
  %v566 = vpop.f32.mrf.mxu0
  %v567 = vadd.f32 0.0, %v566
  %v568 = vpop.f32.mrf.mxu0
  %v569 = vpop.f32.mrf.mxu0
  %v570 = vadd.f32 0.0, %v569
  %v571 = vpop.f32.mrf.mxu0
  %572 = vmatprep.mubr.bf16.mxu0 0
  %573 = vmatmul.mubr.bf16.gmra.mxu0 %v421
  %v574 = vpop.f32.mrf.mxu0
  %v575 = vadd.f32 0.0, %v574
  %v576 = vpop.f32.mrf.mxu0
  %v577 = vpop.f32.mrf.mxu0
  %v578 = vadd.f32 0.0, %v577
  %v579 = vpop.f32.mrf.mxu0
  %580 = vmatprep.mubr.bf16.mxu0 0
  %581 = vmatmul.mubr.bf16.gmra.mxu0 %v422
  %v582 = vpop.f32.mrf.mxu0
  %v583 = vadd.f32 0.0, %v582
  %v584 = vpop.f32.mrf.mxu0
  %v585 = vpop.f32.mrf.mxu0
  %v586 = vadd.f32 0.0, %v585
  %v587 = vpop.f32.mrf.mxu0
  %588 = vmatprep.mubr.bf16.mxu0 0
  %589 = vmatmul.mubr.bf16.gmra.mxu0 %v423
  %v590 = vpop.f32.mrf.mxu0
  %v591 = vadd.f32 0.0, %v590
  %v592 = vpop.f32.mrf.mxu0
  %v593 = vpop.f32.mrf.mxu0
  %v594 = vadd.f32 0.0, %v593
  %v595 = vpop.f32.mrf.mxu0
  %596 = vmatprep.mubr.bf16.mxu0 0
  %597 = vmatmul.mubr.bf16.gmra.mxu0 %v424
  %v598 = vpop.f32.mrf.mxu0
  %v599 = vadd.f32 0.0, %v598
  %v600 = vpop.f32.mrf.mxu0
  %v601 = vpop.f32.mrf.mxu0
  %v602 = vadd.f32 0.0, %v601
  %v603 = vpop.f32.mrf.mxu0
  %604 = vmatprep.mubr.bf16.mxu0 0
  %605 = vmatmul.mubr.bf16.gmra.mxu0 %v425
  %v606 = vpop.f32.mrf.mxu0
  %v607 = vadd.f32 0.0, %v606
  %v608 = vpop.f32.mrf.mxu0
  %v609 = vpop.f32.mrf.mxu0
  %v610 = vadd.f32 0.0, %v609
  %v611 = vpop.f32.mrf.mxu0
  %612 = vmatprep.mubr.bf16.mxu0 0
  %613 = vmatmul.mubr.bf16.gmra.mxu0 %v426
  %v614 = vpop.f32.mrf.mxu0
  %v615 = vadd.f32 0.0, %v614
  %v616 = vpop.f32.mrf.mxu0
  %v617 = vpop.f32.mrf.mxu0
  %v618 = vadd.f32 0.0, %v617
  %v619 = vpop.f32.mrf.mxu0
  %620 = vmatprep.mubr.bf16.mxu0 0
  %621 = vmatmul.mubr.bf16.gmra.mxu0 %v427
  %v622 = vpop.f32.mrf.mxu0
  %v623 = vadd.f32 0.0, %v622
  %v624 = vpop.f32.mrf.mxu0
  %v625 = vpop.f32.mrf.mxu0
  %v626 = vadd.f32 0.0, %v625
  %v627 = vpop.f32.mrf.mxu0
  %628 = vdwg.mxu0
  %v629 = vadd.f32 %v389, %v527
  %v630 = vadd.f32 %v390, %v530
  %v631 = vadd.f32 %v391, %v535
  %v632 = vadd.f32 %v392, %v538
  %v633 = vadd.f32 %v393, %v543
  %v634 = vadd.f32 %v394, %v546
  %v635 = vadd.f32 %v395, %v551
  %v636 = vadd.f32 %v396, %v554
  %v637 = vadd.f32 %v397, %v559
  %v638 = vadd.f32 %v398, %v562
  %v639 = vadd.f32 %v399, %v567
  %v640 = vadd.f32 %v400, %v570
  %v641 = vadd.f32 %v401, %v575
  %v642 = vadd.f32 %v402, %v578
  %v643 = vadd.f32 %v403, %v583
  %v644 = vadd.f32 %v404, %v586
  %v645 = vadd.f32 %v405, %v591
  %v646 = vadd.f32 %v406, %v594
  %v647 = vadd.f32 %v407, %v599
  %v648 = vadd.f32 %v408, %v602
  %v649 = vadd.f32 %v409, %v607
  %v650 = vadd.f32 %v410, %v610
  %v651 = vadd.f32 %v411, %v615
  %v652 = vadd.f32 %v412, %v618
  %v653 = vadd.f32 %v413, %v623
  %v654 = vadd.f32 %v414, %v626
  %655 = vst [vmem:[#allocation2] sm:$0xff] %v629
  %656 = vst [vmem:[#allocation2 + $0x8] sm:$0xff] %v630
  %657 = vst [vmem:[#allocation2 + $0x10] sm:$0xff] %v631
  %658 = vst [vmem:[#allocation2 + $0x18] sm:$0xff] %v632
  %659 = vst [vmem:[#allocation2 + $0x20] sm:$0xff] %v633
  %660 = vst [vmem:[#allocation2 + $0x28] sm:$0xff] %v634
  %661 = vst [vmem:[#allocation2 + $0x30] sm:$0xff] %v635
  %662 = vst [vmem:[#allocation2 + $0x38] sm:$0xff] %v636
  %663 = vst [vmem:[#allocation2 + $0x40] sm:$0xff] %v637
  %664 = vst [vmem:[#allocation2 + $0x48] sm:$0xff] %v638
  %665 = vst [vmem:[#allocation2 + $0x50] sm:$0xff] %v639
  %666 = vst [vmem:[#allocation2 + $0x58] sm:$0xff] %v640
  %667 = vst [vmem:[#allocation2 + $0x60] sm:$0xff] %v641
  %668 = vst [vmem:[#allocation2 + $0x68] sm:$0xff] %v642
  %669 = vst [vmem:[#allocation2 + $0x70] sm:$0xff] %v643
  %670 = vst [vmem:[#allocation2 + $0x78] sm:$0xff] %v644
  %671 = vst [vmem:[#allocation2 + $0x80] sm:$0xff] %v645
  %672 = vst [vmem:[#allocation2 + $0x88] sm:$0xff] %v646
  %673 = vst [vmem:[#allocation2 + $0x90] sm:$0xff] %v647
  %674 = vst [vmem:[#allocation2 + $0x98] sm:$0xff] %v648
  %675 = vst [vmem:[#allocation2 + $0xa0] sm:$0xff] %v649
  %676 = vst [vmem:[#allocation2 + $0xa8] sm:$0xff] %v650
  %677 = vst [vmem:[#allocation2 + $0xb0] sm:$0xff] %v651
  %678 = vst [vmem:[#allocation2 + $0xb8] sm:$0xff] %v652
  %679 = vst [vmem:[#allocation2 + $0xc0] sm:$0xff] %v653
  %680 = vst [vmem:[#allocation2 + $0xc8] sm:$0xff] %v654
  // Predicated region
  $region26: #{mlp_forward.1} parent=0 // pred_check
    %p681 = pneg %p21
  $region27: #{mlp_forward.1} parent=0 // pred_check_branch
    %683 = sbr.rel (%p681) target = $region29
  $region28: #{mlp_forward.1} parent=0 // pred_region
    %v684 = vld [vmem:[#allocation2] sm:$0xff]
    %v685 = vld [vmem:[#allocation2 + $0x8] sm:$0xff]
    %v686 = vld [vmem:[#allocation2 + $0x10] sm:$0xff]
    %v687 = vld [vmem:[#allocation2 + $0x18] sm:$0xff]
    %v688 = vld [vmem:[#allocation2 + $0x20] sm:$0xff]
    %v689 = vld [vmem:[#allocation2 + $0x28] sm:$0xff]
    %v690 = vld [vmem:[#allocation2 + $0x30] sm:$0xff]
    %v691 = vld [vmem:[#allocation2 + $0x38] sm:$0xff]
    %v692 = vld [vmem:[#allocation2 + $0x40] sm:$0xff]
    %v693 = vld [vmem:[#allocation2 + $0x48] sm:$0xff]
    %v694 = vld [vmem:[#allocation2 + $0x50] sm:$0xff]
    %v695 = vld [vmem:[#allocation2 + $0x58] sm:$0xff]
    %v696 = vld [vmem:[#allocation2 + $0x60] sm:$0xff]
    %v697 = vld [vmem:[#allocation2 + $0x68] sm:$0xff]
    %v698 = vld [vmem:[#allocation2 + $0x70] sm:$0xff]
    %v699 = vld [vmem:[#allocation2 + $0x78] sm:$0xff]
    %v700 = vld [vmem:[#allocation2 + $0x80] sm:$0xff]
    %v701 = vld [vmem:[#allocation2 + $0x88] sm:$0xff]
    %v702 = vld [vmem:[#allocation2 + $0x90] sm:$0xff]
    %v703 = vld [vmem:[#allocation2 + $0x98] sm:$0xff]
    %v704 = vld [vmem:[#allocation2 + $0xa0] sm:$0xff]
    %v705 = vld [vmem:[#allocation2 + $0xa8] sm:$0xff]
    %v706 = vld [vmem:[#allocation2 + $0xb0] sm:$0xff]
    %v707 = vld [vmem:[#allocation2 + $0xb8] sm:$0xff]
    %v708 = vld [vmem:[#allocation2 + $0xc0] sm:$0xff]
    %v709 = vld [vmem:[#allocation2 + $0xc8] sm:$0xff]
    %v710 = vld [vmem:[%s4] sm:$0x1]
    %v712 = vlaneseq
    %v713 = vshrl.u32 %v712, 7
    %v714 = vsub.s32 0, %v713
    %v715 = vrot.slane %v710, %v714
    %v717 = vadd.f32 %v684, %v715
    %v718 = vadd.f32 %v685, %v715
    %v719 = vadd.f32 %v686, %v715
    %v720 = vadd.f32 %v687, %v715
    %v721 = vadd.f32 %v688, %v715
    %v722 = vadd.f32 %v689, %v715
    %v723 = vadd.f32 %v690, %v715
    %v724 = vadd.f32 %v691, %v715
    %v725 = vadd.f32 %v692, %v715
    %v726 = vadd.f32 %v693, %v715
    %v727 = vadd.f32 %v694, %v715
    %v728 = vadd.f32 %v695, %v715
    %v729 = vadd.f32 %v696, %v715
    %v730 = vadd.f32 %v697, %v715
    %v731 = vadd.f32 %v698, %v715
    %v732 = vadd.f32 %v699, %v715
    %v733 = vadd.f32 %v700, %v715
    %v734 = vadd.f32 %v701, %v715
    %v735 = vadd.f32 %v702, %v715
    %v736 = vadd.f32 %v703, %v715
    %v737 = vadd.f32 %v704, %v715
    %v738 = vadd.f32 %v705, %v715
    %v739 = vadd.f32 %v706, %v715
    %v740 = vadd.f32 %v707, %v715
    %v741 = vadd.f32 %v708, %v715
    %v742 = vadd.f32 %v709, %v715
    %743 = vst [vmem:[%s5] sm:$0xff] %v717
    %744 = vst [vmem:[%s5 + $0x8] sm:$0xff] %v718
    %745 = vst [vmem:[%s5 + $0x10] sm:$0xff] %v719
    %746 = vst [vmem:[%s5 + $0x18] sm:$0xff] %v720
    %747 = vst [vmem:[%s5 + $0x20] sm:$0xff] %v721
    %748 = vst [vmem:[%s5 + $0x28] sm:$0xff] %v722
    %749 = vst [vmem:[%s5 + $0x30] sm:$0xff] %v723
    %750 = vst [vmem:[%s5 + $0x38] sm:$0xff] %v724
    %751 = vst [vmem:[%s5 + $0x40] sm:$0xff] %v725
    %752 = vst [vmem:[%s5 + $0x48] sm:$0xff] %v726
    %753 = vst [vmem:[%s5 + $0x50] sm:$0xff] %v727
    %754 = vst [vmem:[%s5 + $0x58] sm:$0xff] %v728
    %755 = vst [vmem:[%s5 + $0x60] sm:$0xff] %v729
    %756 = vst [vmem:[%s5 + $0x68] sm:$0xff] %v730
    %757 = vst [vmem:[%s5 + $0x70] sm:$0xff] %v731
    %758 = vst [vmem:[%s5 + $0x78] sm:$0xff] %v732
    %759 = vst [vmem:[%s5 + $0x80] sm:$0xff] %v733
    %760 = vst [vmem:[%s5 + $0x88] sm:$0xff] %v734
    %761 = vst [vmem:[%s5 + $0x90] sm:$0xff] %v735
    %762 = vst [vmem:[%s5 + $0x98] sm:$0xff] %v736
    %763 = vst [vmem:[%s5 + $0xa0] sm:$0xff] %v737
    %764 = vst [vmem:[%s5 + $0xa8] sm:$0xff] %v738
    %765 = vst [vmem:[%s5 + $0xb0] sm:$0xff] %v739
    %766 = vst [vmem:[%s5 + $0xb8] sm:$0xff] %v740
    %767 = vst [vmem:[%s5 + $0xc0] sm:$0xff] %v741
    %768 = vst [vmem:[%s5 + $0xc8] sm:$0xff] %v742
  $region29: #{mlp_forward.1} parent=0 // pred_fallthru
    _
  // Predicated region
  $region30: #{mlp_forward.1} parent=0 // pred_check
    _
  $region31: #{mlp_forward.1} parent=0 // pred_check_branch
    %770 = sbr.rel (0) target = $region33
  $region32: #{mlp_forward.1} parent=0 // pred_region
    _
  $region33: #{mlp_forward.1} parent=0 // pred_fallthru
    _
  // Predicated region
  $region34: #{mlp_forward.1} parent=0 // pred_check
    _
  $region35: #{mlp_forward.1} parent=0 // pred_check_branch
    %772 = sbr.rel (0) target = $region37
  $region36: #{mlp_forward.1} parent=0 // pred_region
    _
  $region37: #{mlp_forward.1} parent=0 // pred_fallthru
    _

// kernel: mlp_forward.1
$region0: #{mlp_forward.1}
  #allocation0 [shape = 'u32[]', space=smem, size = 0x4, offset = 0x4, fixed_abs, tag = 'smem constant byte address 0x4 - core index']
  #allocation1 [shape = 'u32[144,128]{1,0:T(1,128)}', space=vmem, size = 0x12000, scoped, tag = 'internal scratch']
  #allocation2 [shape = 'f32[208,128]{1,0:T(8,128)}', space=vmem, size = 0x1a000, scoped, tag = 'scratch operand']
  %s0 = inlined_call_operand.vmem [shape: bf16[208,128], index: 0, kind: input, shape index: {}]
  %s1 = inlined_call_operand.vmem [shape: bf16[128,128], index: 1, kind: input, shape index: {}]
  %s2 = inlined_call_operand.vmem [shape: f32[1,128], index: 2, kind: input, shape index: {}]
  %s3 = inlined_call_operand.vmem [shape: bf16[128,128], index: 3, kind: input, shape index: {}]
  %s4 = inlined_call_operand.vmem [shape: f32[1,128], index: 4, kind: input, shape index: {}]
  %s5 = inlined_call_operand.vmem [shape: f32[208,128], index: 5, kind: output, shape index: {}]
  %s6 = sld [smem:[#allocation0]]
  $region38: #{mlp_forward.1} parent=0
    _
  %s8 = ssub.s32 1, %s6
  %s9 = scalar_select 0, %s8, %s6
  // Predicated region
  $region2: #{mlp_forward.1} parent=0 // pred_check
    _
  $region3: #{mlp_forward.1} parent=0 // pred_check_branch
    %11 = sbr.rel (0) target = $region5
  $region4: #{mlp_forward.1} parent=0 // pred_region
    _
  $region5: #{mlp_forward.1} parent=0 // pred_fallthru
    _
  // Predicated region
  $region6: #{mlp_forward.1} parent=0 // pred_check
    _
  $region7: #{mlp_forward.1} parent=0 // pred_check_branch
    %13 = sbr.rel (0) target = $region9
  $region8: #{mlp_forward.1} parent=0 // pred_region
    _
  $region9: #{mlp_forward.1} parent=0 // pred_fallthru
    _
  // Predicated region
  $region10: #{mlp_forward.1} parent=0 // pred_check
    _
  $region11: #{mlp_forward.1} parent=0 // pred_check_branch
    %15 = sbr.rel (0) target = $region13
  $region12: #{mlp_forward.1} parent=0 // pred_region
    _
  $region13: #{mlp_forward.1} parent=0 // pred_fallthru
    _
  // Predicated region
  $region14: #{mlp_forward.1} parent=0 // pred_check
    _
  $region15: #{mlp_forward.1} parent=0 // pred_check_branch
    %17 = sbr.rel (0) target = $region17
  $region16: #{mlp_forward.1} parent=0 // pred_region
    _
  $region17: #{mlp_forward.1} parent=0 // pred_fallthru
    _
  // Predicated region
  $region18: #{mlp_forward.1} parent=0 // pred_check
    _
  $region19: #{mlp_forward.1} parent=0 // pred_check_branch
    %19 = sbr.rel (0) target = $region21
  $region20: #{mlp_forward.1} parent=0 // pred_region
    _
  $region21: #{mlp_forward.1} parent=0 // pred_fallthru
    _
  %p21 = scmp.eq.s32.totalorder 0, 0
  // Predicated region
  $region22: #{mlp_forward.1} parent=0 // pred_check
    %p22 = pneg %p21
  $region23: #{mlp_forward.1} parent=0 // pred_check_branch
    %24 = sbr.rel (%p22) target = $region25
  $region24: #{mlp_forward.1} parent=0 // pred_region
    %25 = vst [vmem:[#allocation2] sm:$0xff] 0.0
    %26 = vst [vmem:[#allocation2 + $0x8] sm:$0xff] 0.0
    %27 = vst [vmem:[#allocation2 + $0x10] sm:$0xff] 0.0
    %28 = vst [vmem:[#allocation2 + $0x18] sm:$0xff] 0.0
    %29 = vst [vmem:[#allocation2 + $0x20] sm:$0xff] 0.0
    %30 = vst [vmem:[#allocation2 + $0x28] sm:$0xff] 0.0
    %31 = vst [vmem:[#allocation2 + $0x30] sm:$0xff] 0.0
    %32 = vst [vmem:[#allocation2 + $0x38] sm:$0xff] 0.0
    %33 = vst [vmem:[#allocation2 + $0x40] sm:$0xff] 0.0
    %34 = vst [vmem:[#allocation2 + $0x48] sm:$0xff] 0.0
    %35 = vst [vmem:[#allocation2 + $0x50] sm:$0xff] 0.0
    %36 = vst [vmem:[#allocation2 + $0x58] sm:$0xff] 0.0
    %37 = vst [vmem:[#allocation2 + $0x60] sm:$0xff] 0.0
    %38 = vst [vmem:[#allocation2 + $0x68] sm:$0xff] 0.0
    %39 = vst [vmem:[#allocation2 + $0x70] sm:$0xff] 0.0
    %40 = vst [vmem:[#allocation2 + $0x78] sm:$0xff] 0.0
    %41 = vst [vmem:[#allocation2 + $0x80] sm:$0xff] 0.0
    %42 = vst [vmem:[#allocation2 + $0x88] sm:$0xff] 0.0
    %43 = vst [vmem:[#allocation2 + $0x90] sm:$0xff] 0.0
    %44 = vst [vmem:[#allocation2 + $0x98] sm:$0xff] 0.0
    %45 = vst [vmem:[#allocation2 + $0xa0] sm:$0xff] 0.0
    %46 = vst [vmem:[#allocation2 + $0xa8] sm:$0xff] 0.0
    %47 = vst [vmem:[#allocation2 + $0xb0] sm:$0xff] 0.0
    %48 = vst [vmem:[#allocation2 + $0xb8] sm:$0xff] 0.0
    %49 = vst [vmem:[#allocation2 + $0xc0] sm:$0xff] 0.0
    %50 = vst [vmem:[#allocation2 + $0xc8] sm:$0xff] 0.0
  $region25: #{mlp_forward.1} parent=0 // pred_fallthru
    _
  %v51 = vld [vmem:[%s0] sm:$0xf]
  %v52 = vld [vmem:[%s0 + $0x4] sm:$0xf]
  %v53 = vld [vmem:[%s0 + $0x8] sm:$0xf]
  %v54 = vld [vmem:[%s0 + $0xc] sm:$0xf]
  %v55 = vld [vmem:[%s0 + $0x10] sm:$0xf]
  %v56 = vld [vmem:[%s0 + $0x14] sm:$0xf]
  %v57 = vld [vmem:[%s0 + $0x18] sm:$0xf]
  %v58 = vld [vmem:[%s0 + $0x1c] sm:$0xf]
  %v59 = vld [vmem:[%s0 + $0x20] sm:$0xf]
  %v60 = vld [vmem:[%s0 + $0x24] sm:$0xf]
  %v61 = vld [vmem:[%s0 + $0x28] sm:$0xf]
  %v62 = vld [vmem:[%s0 + $0x2c] sm:$0xf]
  %v63 = vld [vmem:[%s0 + $0x30] sm:$0xf]
  %v64 = vld [vmem:[%s0 + $0x34] sm:$0xf]
  %v65 = vld [vmem:[%s0 + $0x38] sm:$0xf]
  %v66 = vld [vmem:[%s0 + $0x3c] sm:$0xf]
  %v67 = vld [vmem:[%s0 + $0x40] sm:$0xf]
  %v68 = vld [vmem:[%s0 + $0x44] sm:$0xf]
  %v69 = vld [vmem:[%s0 + $0x48] sm:$0xf]
  %v70 = vld [vmem:[%s0 + $0x4c] sm:$0xf]
  %v71 = vld [vmem:[%s0 + $0x50] sm:$0xf]
  %v72 = vld [vmem:[%s0 + $0x54] sm:$0xf]
  %v73 = vld [vmem:[%s0 + $0x58] sm:$0xf]
  %v74 = vld [vmem:[%s0 + $0x5c] sm:$0xf]
  %v75 = vld [vmem:[%s0 + $0x60] sm:$0xf]
  %v76 = vld [vmem:[%s0 + $0x64] sm:$0xf]
  %v77 = vld [vmem:[%s1] sm:$0xf]
  %v78 = vld [vmem:[%s1 + $0x4] sm:$0xf]
  %v79 = vld [vmem:[%s1 + $0x8] sm:$0xf]
  %v80 = vld [vmem:[%s1 + $0xc] sm:$0xf]
  %v81 = vld [vmem:[%s1 + $0x10] sm:$0xf]
  %v82 = vld [vmem:[%s1 + $0x14] sm:$0xf]
  %v83 = vld [vmem:[%s1 + $0x18] sm:$0xf]
  %v84 = vld [vmem:[%s1 + $0x1c] sm:$0xf]
  %v85 = vld [vmem:[%s1 + $0x20] sm:$0xf]
  %v86 = vld [vmem:[%s1 + $0x24] sm:$0xf]
  %v87 = vld [vmem:[%s1 + $0x28] sm:$0xf]
  %v88 = vld [vmem:[%s1 + $0x2c] sm:$0xf]
  %v89 = vld [vmem:[%s1 + $0x30] sm:$0xf]
  %v90 = vld [vmem:[%s1 + $0x34] sm:$0xf]
  %v91 = vld [vmem:[%s1 + $0x38] sm:$0xf]
  %v92 = vld [vmem:[%s1 + $0x3c] sm:$0xf]
  %v93 = vld [vmem:[%s2] sm:$0x1]
  %v95 = vlaneseq
  %v96 = vshrl.u32 %v95, 7
  %v97 = vsub.s32 0, %v96
  %v98 = vrot.slane %v93, %v97
  %v126 = vunpack.c.l.b16 %v51
  %v127 = vunpack.c.l.b16 %v52
  %v128 = vunpack.c.l.b16 %v53
  %v129 = vunpack.c.l.b16 %v54
  %v130 = vunpack.c.l.b16 %v55
  %v131 = vunpack.c.l.b16 %v56
  %v132 = vunpack.c.l.b16 %v57
  %v133 = vunpack.c.l.b16 %v58
  %v134 = vunpack.c.l.b16 %v59
  %v135 = vunpack.c.l.b16 %v60
  %v136 = vunpack.c.l.b16 %v61
  %v137 = vunpack.c.l.b16 %v62
  %v138 = vunpack.c.l.b16 %v63
  %v139 = vunpack.c.l.b16 %v64
  %v140 = vunpack.c.l.b16 %v65
  %v141 = vunpack.c.l.b16 %v66
  %v142 = vunpack.c.l.b16 %v67
  %v143 = vunpack.c.l.b16 %v68
  %v144 = vunpack.c.l.b16 %v69
  %v145 = vunpack.c.l.b16 %v70
  %v146 = vunpack.c.l.b16 %v71
  %v147 = vunpack.c.l.b16 %v72
  %v148 = vunpack.c.l.b16 %v73
  %v149 = vunpack.c.l.b16 %v74
  %v150 = vunpack.c.l.b16 %v75
  %v151 = vunpack.c.l.b16 %v76
  %v152 = vpack.c.b16 %v127, %v126
  %v153 = vpack.c.b16 %v129, %v128
  %v154 = vpack.c.b16 %v131, %v130
  %v155 = vpack.c.b16 %v133, %v132
  %v156 = vpack.c.b16 %v135, %v134
  %v157 = vpack.c.b16 %v137, %v136
  %v158 = vpack.c.b16 %v139, %v138
  %v159 = vpack.c.b16 %v141, %v140
  %v160 = vpack.c.b16 %v143, %v142
  %v161 = vpack.c.b16 %v145, %v144
  %v162 = vpack.c.b16 %v147, %v146
  %v163 = vpack.c.b16 %v149, %v148
  %v164 = vpack.c.b16 %v151, %v150
  %v194 = vunpack.c.l.b16 %v77
  %v195 = vunpack.c.l.b16 %v78
  %v196 = vunpack.c.l.b16 %v79
  %v197 = vunpack.c.l.b16 %v80
  %v198 = vunpack.c.l.b16 %v81
  %v199 = vunpack.c.l.b16 %v82
  %v200 = vunpack.c.l.b16 %v83
  %v201 = vunpack.c.l.b16 %v84
  %v202 = vunpack.c.l.b16 %v85
  %v203 = vunpack.c.l.b16 %v86
  %v204 = vunpack.c.l.b16 %v87
  %v205 = vunpack.c.l.b16 %v88
  %v206 = vunpack.c.l.b16 %v89
  %v207 = vunpack.c.l.b16 %v90
  %v208 = vunpack.c.l.b16 %v91
  %v209 = vunpack.c.l.b16 %v92
  %v210 = vpack.c.b16 %v195, %v194
  %v211 = vpack.c.b16 %v197, %v196
  %v212 = vpack.c.b16 %v199, %v198
  %v213 = vpack.c.b16 %v201, %v200
  %v214 = vpack.c.b16 %v203, %v202
  %v215 = vpack.c.b16 %v205, %v204
  %v216 = vpack.c.b16 %v207, %v206
  %v217 = vpack.c.b16 %v209, %v208
  %226 = vmatprep.subr.bf16.mxu0 0
  %227 = vmatpush1.bf16.msra.mxu0 %v217
  %228 = vmatprep.subr.bf16.mxu0 0
  %229 = vmatpush1.bf16.msra.mxu0 %v216
  %230 = vmatprep.subr.bf16.mxu0 0
  %231 = vmatpush1.bf16.msra.mxu0 %v215
  %232 = vmatprep.subr.bf16.mxu0 0
  %233 = vmatpush1.bf16.msra.mxu0 %v214
  %234 = vmatprep.subr.bf16.mxu0 0
  %235 = vmatpush1.bf16.msra.mxu0 %v213
  %236 = vmatprep.subr.bf16.mxu0 0
  %237 = vmatpush1.bf16.msra.mxu0 %v212
  %238 = vmatprep.subr.bf16.mxu0 0
  %239 = vmatpush1.bf16.msra.mxu0 %v211
  %240 = vmatprep.subr.bf16.mxu0 0
  %241 = vmatpush1.bf16.msra.mxu0 %v210
  %242 = vmatprep.subr.bf16.mxu0 0
  %243 = vmatpush2.bf16.msra.mxu0 0
  %244 = vmatprep.subr.bf16.mxu0 0
  %245 = vmatpush2.bf16.msra.mxu0 0
  %246 = vmatprep.subr.bf16.mxu0 0
  %247 = vmatpush2.bf16.msra.mxu0 0
  %248 = vmatprep.subr.bf16.mxu0 0
  %249 = vmatpush2.bf16.msra.mxu0 0
  %250 = vmatprep.subr.bf16.mxu0 0
  %251 = vmatpush2.bf16.msra.mxu0 0
  %252 = vmatprep.subr.bf16.mxu0 0
  %253 = vmatpush2.bf16.msra.mxu0 0
  %254 = vmatprep.subr.bf16.mxu0 0
  %255 = vmatpush2.bf16.msra.mxu0 0
  %256 = vmatprep.subr.bf16.mxu0 0
  %257 = vmatpush2.bf16.msra.mxu0 0
  %258 = vmatprep.mubr.bf16.mxu0 0
  %259 = vmatmul.mubr.bf16.gmra.mxu0 %v152
  %v260 = vpop.f32.mrf.mxu0
  %v261 = vadd.f32 %v98, %v260
  %v262 = vpop.f32.mrf.mxu0
  %v263 = vpop.f32.mrf.mxu0
  %v264 = vadd.f32 %v98, %v263
  %v265 = vpop.f32.mrf.mxu0
  %266 = vmatprep.mubr.bf16.mxu0 0
  %267 = vmatmul.mubr.bf16.gmra.mxu0 %v153
  %v268 = vpop.f32.mrf.mxu0
  %v269 = vadd.f32 %v98, %v268
  %v270 = vpop.f32.mrf.mxu0
  %v271 = vpop.f32.mrf.mxu0
  %v272 = vadd.f32 %v98, %v271
  %v273 = vpop.f32.mrf.mxu0
  %274 = vmatprep.mubr.bf16.mxu0 0
  %275 = vmatmul.mubr.bf16.gmra.mxu0 %v154
  %v276 = vpop.f32.mrf.mxu0
  %v277 = vadd.f32 %v98, %v276
  %v278 = vpop.f32.mrf.mxu0
  %v279 = vpop.f32.mrf.mxu0
  %v280 = vadd.f32 %v98, %v279
  %v281 = vpop.f32.mrf.mxu0
  %282 = vmatprep.mubr.bf16.mxu0 0
  %283 = vmatmul.mubr.bf16.gmra.mxu0 %v155
  %v284 = vpop.f32.mrf.mxu0
  %v285 = vadd.f32 %v98, %v284
  %v286 = vpop.f32.mrf.mxu0
  %v287 = vpop.f32.mrf.mxu0
  %v288 = vadd.f32 %v98, %v287
  %v289 = vpop.f32.mrf.mxu0
  %290 = vmatprep.mubr.bf16.mxu0 0
  %291 = vmatmul.mubr.bf16.gmra.mxu0 %v156
  %v292 = vpop.f32.mrf.mxu0
  %v293 = vadd.f32 %v98, %v292
  %v294 = vpop.f32.mrf.mxu0
  %v295 = vpop.f32.mrf.mxu0
  %v296 = vadd.f32 %v98, %v295
  %v297 = vpop.f32.mrf.mxu0
  %298 = vmatprep.mubr.bf16.mxu0 0
  %299 = vmatmul.mubr.bf16.gmra.mxu0 %v157
  %v300 = vpop.f32.mrf.mxu0
  %v301 = vadd.f32 %v98, %v300
  %v302 = vpop.f32.mrf.mxu0
  %v303 = vpop.f32.mrf.mxu0
  %v304 = vadd.f32 %v98, %v303
  %v305 = vpop.f32.mrf.mxu0
  %306 = vmatprep.mubr.bf16.mxu0 0
  %307 = vmatmul.mubr.bf16.gmra.mxu0 %v158
  %v308 = vpop.f32.mrf.mxu0
  %v309 = vadd.f32 %v98, %v308
  %v310 = vpop.f32.mrf.mxu0
  %v311 = vpop.f32.mrf.mxu0
  %v312 = vadd.f32 %v98, %v311
  %v313 = vpop.f32.mrf.mxu0
  %314 = vmatprep.mubr.bf16.mxu0 0
  %315 = vmatmul.mubr.bf16.gmra.mxu0 %v159
  %v316 = vpop.f32.mrf.mxu0
  %v317 = vadd.f32 %v98, %v316
  %v318 = vpop.f32.mrf.mxu0
  %v319 = vpop.f32.mrf.mxu0
  %v320 = vadd.f32 %v98, %v319
  %v321 = vpop.f32.mrf.mxu0
  %322 = vmatprep.mubr.bf16.mxu0 0
  %323 = vmatmul.mubr.bf16.gmra.mxu0 %v160
  %v324 = vpop.f32.mrf.mxu0
  %v325 = vadd.f32 %v98, %v324
  %v326 = vpop.f32.mrf.mxu0
  %v327 = vpop.f32.mrf.mxu0
  %v328 = vadd.f32 %v98, %v327
  %v329 = vpop.f32.mrf.mxu0
  %330 = vmatprep.mubr.bf16.mxu0 0
  %331 = vmatmul.mubr.bf16.gmra.mxu0 %v161
  %v332 = vpop.f32.mrf.mxu0
  %v333 = vadd.f32 %v98, %v332
  %v334 = vpop.f32.mrf.mxu0
  %v335 = vpop.f32.mrf.mxu0
  %v336 = vadd.f32 %v98, %v335
  %v337 = vpop.f32.mrf.mxu0
  %338 = vmatprep.mubr.bf16.mxu0 0
  %339 = vmatmul.mubr.bf16.gmra.mxu0 %v162
  %v340 = vpop.f32.mrf.mxu0
  %v341 = vadd.f32 %v98, %v340
  %v342 = vpop.f32.mrf.mxu0
  %v343 = vpop.f32.mrf.mxu0
  %v344 = vadd.f32 %v98, %v343
  %v345 = vpop.f32.mrf.mxu0
  %346 = vmatprep.mubr.bf16.mxu0 0
  %347 = vmatmul.mubr.bf16.gmra.mxu0 %v163
  %v348 = vpop.f32.mrf.mxu0
  %v349 = vadd.f32 %v98, %v348
  %v350 = vpop.f32.mrf.mxu0
  %v351 = vpop.f32.mrf.mxu0
  %v352 = vadd.f32 %v98, %v351
  %v353 = vpop.f32.mrf.mxu0
  %354 = vmatprep.mubr.bf16.mxu0 0
  %355 = vmatmul.mubr.bf16.gmra.mxu0 %v164
  %v356 = vpop.f32.mrf.mxu0
  %v357 = vadd.f32 %v98, %v356
  %v358 = vpop.f32.mrf.mxu0
  %v359 = vpop.f32.mrf.mxu0
  %v360 = vadd.f32 %v98, %v359
  %v361 = vpop.f32.mrf.mxu0
  %362 = vdwg.mxu0
  %v363 = vmax.f32 %v261, 0.0
  %v364 = vmax.f32 %v264, 0.0
  %v365 = vmax.f32 %v269, 0.0
  %v366 = vmax.f32 %v272, 0.0
  %v367 = vmax.f32 %v277, 0.0
  %v368 = vmax.f32 %v280, 0.0
  %v369 = vmax.f32 %v285, 0.0
  %v370 = vmax.f32 %v288, 0.0
  %v371 = vmax.f32 %v293, 0.0
  %v372 = vmax.f32 %v296, 0.0
  %v373 = vmax.f32 %v301, 0.0
  %v374 = vmax.f32 %v304, 0.0
  %v375 = vmax.f32 %v309, 0.0
  %v376 = vmax.f32 %v312, 0.0
  %v377 = vmax.f32 %v317, 0.0
  %v378 = vmax.f32 %v320, 0.0
  %v379 = vmax.f32 %v325, 0.0
  %v380 = vmax.f32 %v328, 0.0
  %v381 = vmax.f32 %v333, 0.0
  %v382 = vmax.f32 %v336, 0.0
  %v383 = vmax.f32 %v341, 0.0
  %v384 = vmax.f32 %v344, 0.0
  %v385 = vmax.f32 %v349, 0.0
  %v386 = vmax.f32 %v352, 0.0
  %v387 = vmax.f32 %v357, 0.0
  %v388 = vmax.f32 %v360, 0.0
  %v389 = vld [vmem:[#allocation2] sm:$0xff]
  %v390 = vld [vmem:[#allocation2 + $0x8] sm:$0xff]
  %v391 = vld [vmem:[#allocation2 + $0x10] sm:$0xff]
  %v392 = vld [vmem:[#allocation2 + $0x18] sm:$0xff]
  %v393 = vld [vmem:[#allocation2 + $0x20] sm:$0xff]
  %v394 = vld [vmem:[#allocation2 + $0x28] sm:$0xff]
  %v395 = vld [vmem:[#allocation2 + $0x30] sm:$0xff]
  %v396 = vld [vmem:[#allocation2 + $0x38] sm:$0xff]
  %v397 = vld [vmem:[#allocation2 + $0x40] sm:$0xff]
  %v398 = vld [vmem:[#allocation2 + $0x48] sm:$0xff]
  %v399 = vld [vmem:[#allocation2 + $0x50] sm:$0xff]
  %v400 = vld [vmem:[#allocation2 + $0x58] sm:$0xff]
  %v401 = vld [vmem:[#allocation2 + $0x60] sm:$0xff]
  %v402 = vld [vmem:[#allocation2 + $0x68] sm:$0xff]
  %v403 = vld [vmem:[#allocation2 + $0x70] sm:$0xff]
  %v404 = vld [vmem:[#allocation2 + $0x78] sm:$0xff]
  %v405 = vld [vmem:[#allocation2 + $0x80] sm:$0xff]
  %v406 = vld [vmem:[#allocation2 + $0x88] sm:$0xff]
  %v407 = vld [vmem:[#allocation2 + $0x90] sm:$0xff]
  %v408 = vld [vmem:[#allocation2 + $0x98] sm:$0xff]
  %v409 = vld [vmem:[#allocation2 + $0xa0] sm:$0xff]
  %v410 = vld [vmem:[#allocation2 + $0xa8] sm:$0xff]
  %v411 = vld [vmem:[#allocation2 + $0xb0] sm:$0xff]
  %v412 = vld [vmem:[#allocation2 + $0xb8] sm:$0xff]
  %v413 = vld [vmem:[#allocation2 + $0xc0] sm:$0xff]
  %v414 = vld [vmem:[#allocation2 + $0xc8] sm:$0xff]
  %v415 = vpack.c.bf16 %v364, %v363
  %v416 = vpack.c.bf16 %v366, %v365
  %v417 = vpack.c.bf16 %v368, %v367
  %v418 = vpack.c.bf16 %v370, %v369
  %v419 = vpack.c.bf16 %v372, %v371
  %v420 = vpack.c.bf16 %v374, %v373
  %v421 = vpack.c.bf16 %v376, %v375
  %v422 = vpack.c.bf16 %v378, %v377
  %v423 = vpack.c.bf16 %v380, %v379
  %v424 = vpack.c.bf16 %v382, %v381
  %v425 = vpack.c.bf16 %v384, %v383
  %v426 = vpack.c.bf16 %v386, %v385
  %v427 = vpack.c.bf16 %v388, %v387
  %v428 = vld [vmem:[%s3] sm:$0xf]
  %v429 = vld [vmem:[%s3 + $0x4] sm:$0xf]
  %v430 = vld [vmem:[%s3 + $0x8] sm:$0xf]
  %v431 = vld [vmem:[%s3 + $0xc] sm:$0xf]
  %v432 = vld [vmem:[%s3 + $0x10] sm:$0xf]
  %v433 = vld [vmem:[%s3 + $0x14] sm:$0xf]
  %v434 = vld [vmem:[%s3 + $0x18] sm:$0xf]
  %v435 = vld [vmem:[%s3 + $0x1c] sm:$0xf]
  %v436 = vld [vmem:[%s3 + $0x20] sm:$0xf]
  %v437 = vld [vmem:[%s3 + $0x24] sm:$0xf]
  %v438 = vld [vmem:[%s3 + $0x28] sm:$0xf]
  %v439 = vld [vmem:[%s3 + $0x2c] sm:$0xf]
  %v440 = vld [vmem:[%s3 + $0x30] sm:$0xf]
  %v441 = vld [vmem:[%s3 + $0x34] sm:$0xf]
  %v442 = vld [vmem:[%s3 + $0x38] sm:$0xf]
  %v443 = vld [vmem:[%s3 + $0x3c] sm:$0xf]
  %v460 = vunpack.c.l.b16 %v428
  %v461 = vunpack.c.l.b16 %v429
  %v462 = vunpack.c.l.b16 %v430
  %v463 = vunpack.c.l.b16 %v431
  %v464 = vunpack.c.l.b16 %v432
  %v465 = vunpack.c.l.b16 %v433
  %v466 = vunpack.c.l.b16 %v434
  %v467 = vunpack.c.l.b16 %v435
  %v468 = vunpack.c.l.b16 %v436
  %v469 = vunpack.c.l.b16 %v437
  %v470 = vunpack.c.l.b16 %v438
  %v471 = vunpack.c.l.b16 %v439
  %v472 = vunpack.c.l.b16 %v440
  %v473 = vunpack.c.l.b16 %v441
  %v474 = vunpack.c.l.b16 %v442
  %v475 = vunpack.c.l.b16 %v443
  %v476 = vpack.c.b16 %v461, %v460
  %v477 = vpack.c.b16 %v463, %v462
  %v478 = vpack.c.b16 %v465, %v464
  %v479 = vpack.c.b16 %v467, %v466
  %v480 = vpack.c.b16 %v469, %v468
  %v481 = vpack.c.b16 %v471, %v470
  %v482 = vpack.c.b16 %v473, %v472
  %v483 = vpack.c.b16 %v475, %v474
  %492 = vmatprep.subr.bf16.mxu0 0
  %493 = vmatpush1.bf16.msra.mxu0 %v483
  %494 = vmatprep.subr.bf16.mxu0 0
  %495 = vmatpush1.bf16.msra.mxu0 %v482
  %496 = vmatprep.subr.bf16.mxu0 0
  %497 = vmatpush1.bf16.msra.mxu0 %v481
  %498 = vmatprep.subr.bf16.mxu0 0
  %499 = vmatpush1.bf16.msra.mxu0 %v480
  %500 = vmatprep.subr.bf16.mxu0 0
  %501 = vmatpush1.bf16.msra.mxu0 %v479
  %502 = vmatprep.subr.bf16.mxu0 0
  %503 = vmatpush1.bf16.msra.mxu0 %v478
  %504 = vmatprep.subr.bf16.mxu0 0
  %505 = vmatpush1.bf16.msra.mxu0 %v477
  %506 = vmatprep.subr.bf16.mxu0 0
  %507 = vmatpush1.bf16.msra.mxu0 %v476
  %508 = vmatprep.subr.bf16.mxu0 0
  %509 = vmatpush2.bf16.msra.mxu0 0
  %510 = vmatprep.subr.bf16.mxu0 0
  %511 = vmatpush2.bf16.msra.mxu0 0
  %512 = vmatprep.subr.bf16.mxu0 0
  %513 = vmatpush2.bf16.msra.mxu0 0
  %514 = vmatprep.subr.bf16.mxu0 0
  %515 = vmatpush2.bf16.msra.mxu0 0
  %516 = vmatprep.subr.bf16.mxu0 0
  %517 = vmatpush2.bf16.msra.mxu0 0
  %518 = vmatprep.subr.bf16.mxu0 0
  %519 = vmatpush2.bf16.msra.mxu0 0
  %520 = vmatprep.subr.bf16.mxu0 0
  %521 = vmatpush2.bf16.msra.mxu0 0
  %522 = vmatprep.subr.bf16.mxu0 0
  %523 = vmatpush2.bf16.msra.mxu0 0
  %524 = vmatprep.mubr.bf16.mxu0 0
  %525 = vmatmul.mubr.bf16.gmra.mxu0 %v415
  %v526 = vpop.f32.mrf.mxu0
  %v527 = vadd.f32 0.0, %v526
  %v528 = vpop.f32.mrf.mxu0
  %v529 = vpop.f32.mrf.mxu0
  %v530 = vadd.f32 0.0, %v529
  %v531 = vpop.f32.mrf.mxu0
  %532 = vmatprep.mubr.bf16.mxu0 0
  %533 = vmatmul.mubr.bf16.gmra.mxu0 %v416
  %v534 = vpop.f32.mrf.mxu0
  %v535 = vadd.f32 0.0, %v534
  %v536 = vpop.f32.mrf.mxu0
  %v537 = vpop.f32.mrf.mxu0
  %v538 = vadd.f32 0.0, %v537
  %v539 = vpop.f32.mrf.mxu0
  %540 = vmatprep.mubr.bf16.mxu0 0
  %541 = vmatmul.mubr.bf16.gmra.mxu0 %v417
  %v542 = vpop.f32.mrf.mxu0
  %v543 = vadd.f32 0.0, %v542
  %v544 = vpop.f32.mrf.mxu0
  %v545 = vpop.f32.mrf.mxu0
  %v546 = vadd.f32 0.0, %v545
  %v547 = vpop.f32.mrf.mxu0
  %548 = vmatprep.mubr.bf16.mxu0 0
  %549 = vmatmul.mubr.bf16.gmra.mxu0 %v418
  %v550 = vpop.f32.mrf.mxu0
  %v551 = vadd.f32 0.0, %v550
  %v552 = vpop.f32.mrf.mxu0
  %v553 = vpop.f32.mrf.mxu0
  %v554 = vadd.f32 0.0, %v553
  %v555 = vpop.f32.mrf.mxu0
  %556 = vmatprep.mubr.bf16.mxu0 0
  %557 = vmatmul.mubr.bf16.gmra.mxu0 %v419
  %v558 = vpop.f32.mrf.mxu0
  %v559 = vadd.f32 0.0, %v558
  %v560 = vpop.f32.mrf.mxu0
  %v561 = vpop.f32.mrf.mxu0
  %v562 = vadd.f32 0.0, %v561
  %v563 = vpop.f32.mrf.mxu0
  %564 = vmatprep.mubr.bf16.mxu0 0
  %565 = vmatmul.mubr.bf16.gmra.mxu0 %v420
  %v566 = vpop.f32.mrf.mxu0
  %v567 = vadd.f32 0.0, %v566
  %v568 = vpop.f32.mrf.mxu0
  %v569 = vpop.f32.mrf.mxu0
  %v570 = vadd.f32 0.0, %v569
  %v571 = vpop.f32.mrf.mxu0
  %572 = vmatprep.mubr.bf16.mxu0 0
  %573 = vmatmul.mubr.bf16.gmra.mxu0 %v421
  %v574 = vpop.f32.mrf.mxu0
  %v575 = vadd.f32 0.0, %v574
  %v576 = vpop.f32.mrf.mxu0
  %v577 = vpop.f32.mrf.mxu0
  %v578 = vadd.f32 0.0, %v577
  %v579 = vpop.f32.mrf.mxu0
  %580 = vmatprep.mubr.bf16.mxu0 0
  %581 = vmatmul.mubr.bf16.gmra.mxu0 %v422
  %v582 = vpop.f32.mrf.mxu0
  %v583 = vadd.f32 0.0, %v582
  %v584 = vpop.f32.mrf.mxu0
  %v585 = vpop.f32.mrf.mxu0
  %v586 = vadd.f32 0.0, %v585
  %v587 = vpop.f32.mrf.mxu0
  %588 = vmatprep.mubr.bf16.mxu0 0
  %589 = vmatmul.mubr.bf16.gmra.mxu0 %v423
  %v590 = vpop.f32.mrf.mxu0
  %v591 = vadd.f32 0.0, %v590
  %v592 = vpop.f32.mrf.mxu0
  %v593 = vpop.f32.mrf.mxu0
  %v594 = vadd.f32 0.0, %v593
  %v595 = vpop.f32.mrf.mxu0
  %596 = vmatprep.mubr.bf16.mxu0 0
  %597 = vmatmul.mubr.bf16.gmra.mxu0 %v424
  %v598 = vpop.f32.mrf.mxu0
  %v599 = vadd.f32 0.0, %v598
  %v600 = vpop.f32.mrf.mxu0
  %v601 = vpop.f32.mrf.mxu0
  %v602 = vadd.f32 0.0, %v601
  %v603 = vpop.f32.mrf.mxu0
  %604 = vmatprep.mubr.bf16.mxu0 0
  %605 = vmatmul.mubr.bf16.gmra.mxu0 %v425
  %v606 = vpop.f32.mrf.mxu0
  %v607 = vadd.f32 0.0, %v606
  %v608 = vpop.f32.mrf.mxu0
  %v609 = vpop.f32.mrf.mxu0
  %v610 = vadd.f32 0.0, %v609
  %v611 = vpop.f32.mrf.mxu0
  %612 = vmatprep.mubr.bf16.mxu0 0
  %613 = vmatmul.mubr.bf16.gmra.mxu0 %v426
  %v614 = vpop.f32.mrf.mxu0
  %v615 = vadd.f32 0.0, %v614
  %v616 = vpop.f32.mrf.mxu0
  %v617 = vpop.f32.mrf.mxu0
  %v618 = vadd.f32 0.0, %v617
  %v619 = vpop.f32.mrf.mxu0
  %620 = vmatprep.mubr.bf16.mxu0 0
  %621 = vmatmul.mubr.bf16.gmra.mxu0 %v427
  %v622 = vpop.f32.mrf.mxu0
  %v623 = vadd.f32 0.0, %v622
  %v624 = vpop.f32.mrf.mxu0
  %v625 = vpop.f32.mrf.mxu0
  %v626 = vadd.f32 0.0, %v625
  %v627 = vpop.f32.mrf.mxu0
  %628 = vdwg.mxu0
  %v629 = vadd.f32 %v389, %v527
  %v630 = vadd.f32 %v390, %v530
  %v631 = vadd.f32 %v391, %v535
  %v632 = vadd.f32 %v392, %v538
  %v633 = vadd.f32 %v393, %v543
  %v634 = vadd.f32 %v394, %v546
  %v635 = vadd.f32 %v395, %v551
  %v636 = vadd.f32 %v396, %v554
  %v637 = vadd.f32 %v397, %v559
  %v638 = vadd.f32 %v398, %v562
  %v639 = vadd.f32 %v399, %v567
  %v640 = vadd.f32 %v400, %v570
  %v641 = vadd.f32 %v401, %v575
  %v642 = vadd.f32 %v402, %v578
  %v643 = vadd.f32 %v403, %v583
  %v644 = vadd.f32 %v404, %v586
  %v645 = vadd.f32 %v405, %v591
  %v646 = vadd.f32 %v406, %v594
  %v647 = vadd.f32 %v407, %v599
  %v648 = vadd.f32 %v408, %v602
  %v649 = vadd.f32 %v409, %v607
  %v650 = vadd.f32 %v410, %v610
  %v651 = vadd.f32 %v411, %v615
  %v652 = vadd.f32 %v412, %v618
  %v653 = vadd.f32 %v413, %v623
  %v654 = vadd.f32 %v414, %v626
  %655 = vst [vmem:[#allocation2] sm:$0xff] %v629
  %656 = vst [vmem:[#allocation2 + $0x8] sm:$0xff] %v630
  %657 = vst [vmem:[#allocation2 + $0x10] sm:$0xff] %v631
  %658 = vst [vmem:[#allocation2 + $0x18] sm:$0xff] %v632
  %659 = vst [vmem:[#allocation2 + $0x20] sm:$0xff] %v633
  %660 = vst [vmem:[#allocation2 + $0x28] sm:$0xff] %v634
  %661 = vst [vmem:[#allocation2 + $0x30] sm:$0xff] %v635
  %662 = vst [vmem:[#allocation2 + $0x38] sm:$0xff] %v636
  %663 = vst [vmem:[#allocation2 + $0x40] sm:$0xff] %v637
  %664 = vst [vmem:[#allocation2 + $0x48] sm:$0xff] %v638
  %665 = vst [vmem:[#allocation2 + $0x50] sm:$0xff] %v639
  %666 = vst [vmem:[#allocation2 + $0x58] sm:$0xff] %v640
  %667 = vst [vmem:[#allocation2 + $0x60] sm:$0xff] %v641
  %668 = vst [vmem:[#allocation2 + $0x68] sm:$0xff] %v642
  %669 = vst [vmem:[#allocation2 + $0x70] sm:$0xff] %v643
  %670 = vst [vmem:[#allocation2 + $0x78] sm:$0xff] %v644
  %671 = vst [vmem:[#allocation2 + $0x80] sm:$0xff] %v645
  %672 = vst [vmem:[#allocation2 + $0x88] sm:$0xff] %v646
  %673 = vst [vmem:[#allocation2 + $0x90] sm:$0xff] %v647
  %674 = vst [vmem:[#allocation2 + $0x98] sm:$0xff] %v648
  %675 = vst [vmem:[#allocation2 + $0xa0] sm:$0xff] %v649
  %676 = vst [vmem:[#allocation2 + $0xa8] sm:$0xff] %v650
  %677 = vst [vmem:[#allocation2 + $0xb0] sm:$0xff] %v651
  %678 = vst [vmem:[#allocation2 + $0xb8] sm:$0xff] %v652
  %679 = vst [vmem:[#allocation2 + $0xc0] sm:$0xff] %v653
  %680 = vst [vmem:[#allocation2 + $0xc8] sm:$0xff] %v654
  // Predicated region
  $region26: #{mlp_forward.1} parent=0 // pred_check
    %p681 = pneg %p21
  $region27: #{mlp_forward.1} parent=0 // pred_check_branch
    %683 = sbr.rel (%p681) target = $region29
  $region28: #{mlp_forward.1} parent=0 // pred_region
    %v684 = vld [vmem:[#allocation2] sm:$0xff]
    %v685 = vld [vmem:[#allocation2 + $0x8] sm:$0xff]
    %v686 = vld [vmem:[#allocation2 + $0x10] sm:$0xff]
    %v687 = vld [vmem:[#allocation2 + $0x18] sm:$0xff]
    %v688 = vld [vmem:[#allocation2 + $0x20] sm:$0xff]
    %v689 = vld [vmem:[#allocation2 + $0x28] sm:$0xff]
    %v690 = vld [vmem:[#allocation2 + $0x30] sm:$0xff]
    %v691 = vld [vmem:[#allocation2 + $0x38] sm:$0xff]
    %v692 = vld [vmem:[#allocation2 + $0x40] sm:$0xff]
    %v693 = vld [vmem:[#allocation2 + $0x48] sm:$0xff]
    %v694 = vld [vmem:[#allocation2 + $0x50] sm:$0xff]
    %v695 = vld [vmem:[#allocation2 + $0x58] sm:$0xff]
    %v696 = vld [vmem:[#allocation2 + $0x60] sm:$0xff]
    %v697 = vld [vmem:[#allocation2 + $0x68] sm:$0xff]
    %v698 = vld [vmem:[#allocation2 + $0x70] sm:$0xff]
    %v699 = vld [vmem:[#allocation2 + $0x78] sm:$0xff]
    %v700 = vld [vmem:[#allocation2 + $0x80] sm:$0xff]
    %v701 = vld [vmem:[#allocation2 + $0x88] sm:$0xff]
    %v702 = vld [vmem:[#allocation2 + $0x90] sm:$0xff]
    %v703 = vld [vmem:[#allocation2 + $0x98] sm:$0xff]
    %v704 = vld [vmem:[#allocation2 + $0xa0] sm:$0xff]
    %v705 = vld [vmem:[#allocation2 + $0xa8] sm:$0xff]
    %v706 = vld [vmem:[#allocation2 + $0xb0] sm:$0xff]
    %v707 = vld [vmem:[#allocation2 + $0xb8] sm:$0xff]
    %v708 = vld [vmem:[#allocation2 + $0xc0] sm:$0xff]
    %v709 = vld [vmem:[#allocation2 + $0xc8] sm:$0xff]
    %v710 = vld [vmem:[%s4] sm:$0x1]
    %v712 = vlaneseq
    %v713 = vshrl.u32 %v712, 7
    %v714 = vsub.s32 0, %v713
    %v715 = vrot.slane %v710, %v714
    %v717 = vadd.f32 %v684, %v715
    %v718 = vadd.f32 %v685, %v715
    %v719 = vadd.f32 %v686, %v715
    %v720 = vadd.f32 %v687, %v715
    %v721 = vadd.f32 %v688, %v715
    %v722 = vadd.f32 %v689, %v715
    %v723 = vadd.f32 %v690, %v715
    %v724 = vadd.f32 %v691, %v715
    %v725 = vadd.f32 %v692, %v715
    %v726 = vadd.f32 %v693, %v715
    %v727 = vadd.f32 %v694, %v715
    %v728 = vadd.f32 %v695, %v715
    %v729 = vadd.f32 %v696, %v715
    %v730 = vadd.f32 %v697, %v715
    %v731 = vadd.f32 %v698, %v715
    %v732 = vadd.f32 %v699, %v715
    %v733 = vadd.f32 %v700, %v715
    %v734 = vadd.f32 %v701, %v715
    %v735 = vadd.f32 %v702, %v715
    %v736 = vadd.f32 %v703, %v715
    %v737 = vadd.f32 %v704, %v715
    %v738 = vadd.f32 %v705, %v715
    %v739 = vadd.f32 %v706, %v715
    %v740 = vadd.f32 %v707, %v715
    %v741 = vadd.f32 %v708, %v715
    %v742 = vadd.f32 %v709, %v715
    %743 = vst [vmem:[%s5] sm:$0xff] %v717
    %744 = vst [vmem:[%s5 + $0x8] sm:$0xff] %v718
    %745 = vst [vmem:[%s5 + $0x10] sm:$0xff] %v719
    %746 = vst [vmem:[%s5 + $0x18] sm:$0xff] %v720
    %747 = vst [vmem:[%s5 + $0x20] sm:$0xff] %v721
    %748 = vst [vmem:[%s5 + $0x28] sm:$0xff] %v722
    %749 = vst [vmem:[%s5 + $0x30] sm:$0xff] %v723
    %750 = vst [vmem:[%s5 + $0x38] sm:$0xff] %v724
    %751 = vst [vmem:[%s5 + $0x40] sm:$0xff] %v725
    %752 = vst [vmem:[%s5 + $0x48] sm:$0xff] %v726
    %753 = vst [vmem:[%s5 + $0x50] sm:$0xff] %v727
    %754 = vst [vmem:[%s5 + $0x58] sm:$0xff] %v728
    %755 = vst [vmem:[%s5 + $0x60] sm:$0xff] %v729
    %756 = vst [vmem:[%s5 + $0x68] sm:$0xff] %v730
    %757 = vst [vmem:[%s5 + $0x70] sm:$0xff] %v731
    %758 = vst [vmem:[%s5 + $0x78] sm:$0xff] %v732
    %759 = vst [vmem:[%s5 + $0x80] sm:$0xff] %v733
    %760 = vst [vmem:[%s5 + $0x88] sm:$0xff] %v734
    %761 = vst [vmem:[%s5 + $0x90] sm:$0xff] %v735
    %762 = vst [vmem:[%s5 + $0x98] sm:$0xff] %v736
    %763 = vst [vmem:[%s5 + $0xa0] sm:$0xff] %v737
    %764 = vst [vmem:[%s5 + $0xa8] sm:$0xff] %v738
    %765 = vst [vmem:[%s5 + $0xb0] sm:$0xff] %v739
    %766 = vst [vmem:[%s5 + $0xb8] sm:$0xff] %v740
    %767 = vst [vmem:[%s5 + $0xc0] sm:$0xff] %v741
    %768 = vst [vmem:[%s5 + $0xc8] sm:$0xff] %v742
  $region29: #{mlp_forward.1} parent=0 // pred_fallthru
    _
  // Predicated region
  $region30: #{mlp_forward.1} parent=0 // pred_check
    _
  $region31: #{mlp_forward.1} parent=0 // pred_check_branch
    %770 = sbr.rel (0) target = $region33
  $region32: #{mlp_forward.1} parent=0 // pred_region
    _
  $region33: #{mlp_forward.1} parent=0 // pred_fallthru
    _
  // Predicated region
  $region34: #{mlp_forward.1} parent=0 // pred_check
    _
  $region35: #{mlp_forward.1} parent=0 // pred_check_branch
    %772 = sbr.rel (0) target = $region37
  $region36: #{mlp_forward.1} parent=0 // pred_region
    _
  $region37: #{mlp_forward.1} parent=0 // pred_fallthru
    _

</llo_original>
